<compile_context>
chip_gen: v7x
topology: tpu7x:2x2x1
jax: 0.10.0
libtpu: 0.0.40
codegen_flags: <defaults>
</compile_context>

<pallas_src>
import jax
import jax.numpy as jnp
from jax.experimental import pallas as pl
from jax.experimental.pallas import tpu as pltpu


# ---------------------------------------------------------------------------
# Kernels
# ---------------------------------------------------------------------------
def ensemble_mean_kernel(x_ref, w_ref, b_ref, out_ref):
    """mode='mean' with offline pre-reduced weights.

    x:(B,D) bf16, w:(D,K) bf16 = mean_m(W_m), b:(1,K) f32 = mean_m(b_m), out:(B,K) f32.
    Single (B,D)@(D,K) MXU matmul, f32 accumulation, bias added once.
    """
    logits = jnp.dot(x_ref[...], w_ref[...], preferred_element_type=jnp.float32)
    out_ref[...] = (logits + b_ref[...]).astype(out_ref.dtype)


def ensemble_ind_kernel(x_ref, w_ref, b_ref, out_ref):
    """mode='ind': per-model logits written directly into the (M, B, K) output.

    x:(B,D) bf16, w:(D,M*K) bf16 (model-major columns, col = m*K + k),
    b:(M,K) f32, out:(M,B,K) f32.  One lane-dense MXU matmul covers all M heads;
    per-head stores are K=128-aligned (masked only on the B=2 sublanes -> trivial).
    """
    M, K = b_ref.shape
    logits = jnp.dot(x_ref[...], w_ref[...], preferred_element_type=jnp.float32)
    for m in range(M):
        out_ref[m] = (logits[:, m * K:(m + 1) * K] + b_ref[m:m + 1, :]).astype(out_ref.dtype)


def ensemble_both_kernel(x_ref, w_ref, b_ref, mean_ref, ind_ref):
    """mean + ind from ONE weight stream / one MXU matmul (two outputs).

    x:(B,D) bf16, w:(D,M*K) bf16, b:(M,K) f32, mean:(B,K) f32, ind:(M,B,K) f32.
    """
    M, K = b_ref.shape
    logits = jnp.dot(x_ref[...], w_ref[...], preferred_element_type=jnp.float32)
    acc = logits[:, 0:K]
    ind_ref[0] = (logits[:, 0:K] + b_ref[0:1, :]).astype(ind_ref.dtype)
    for m in range(1, M):
        sl = logits[:, m * K:(m + 1) * K]
        acc = acc + sl
        ind_ref[m] = (sl + b_ref[m:m + 1, :]).astype(ind_ref.dtype)
    # Mean finalize: (sum_m logits_m + sum_m b_m) / M, bias added once.
    b_sum = jnp.sum(b_ref[...], axis=0, keepdims=True)          # (1, K)
    mean_ref[...] = ((acc + b_sum) * (1.0 / M)).astype(mean_ref.dtype)


# ---------------------------------------------------------------------------
# Init-time layout fold (NOT in the per-forward hot path)
# ---------------------------------------------------------------------------
def prepare_ensemble(weights, biases):
    """weights: (M, D, K) f32, biases: (M, K) f32.

    Folds/reduces once, analogous to EnsembleModel.__init__ holding its models:
      * w_folded: (D, M*K) bf16, model-major columns (col index = m*K + k)
      * w_mean  : (D, K)  bf16, mean over models computed in f32 then cast
      * b       : (M, K)  f32 ;  b_mean: (1, K) f32
    """
    M, D, K = weights.shape
    w_folded = weights.transpose(1, 0, 2).reshape(D, M * K).astype(jnp.bfloat16)
    w_mean = jnp.mean(weights, axis=0).astype(jnp.bfloat16)               # (D, K)
    b_f32 = biases.astype(jnp.float32)                                    # (M, K)
    b_mean = jnp.mean(b_f32, axis=0, keepdims=True)                       # (1, K)
    return {
        "M": M, "D": D, "K": K,
        "w_folded": jax.block_until_ready(w_folded),
        "w_mean": jax.block_until_ready(w_mean),
        "b": jax.block_until_ready(b_f32),
        "b_mean": jax.block_until_ready(b_mean),
    }


# ---------------------------------------------------------------------------
# Forward (hot path)
# ---------------------------------------------------------------------------
def ensemble_forward(params, x_nchw, mode="mean"):
    """x_nchw: (B, C, H, W) with C*H*W == D.  mode in {'mean', 'ind', 'both'}."""
    B = x_nchw.shape[0]
    M, D, K = params["M"], params["D"], params["K"]

    # Per-call activation plumbing only (4 KiB at these sizes); weights are pre-folded.
    x_flat = x_nchw.reshape(B, D).astype(jnp.bfloat16)

    vspec = pl.BlockSpec(memory_space=pltpu.MemorySpace.VMEM)

    if mode == "mean":
        cost = pl.CostEstimate(
            flops=2 * B * D * K, transcendentals=0,
            bytes_accessed=D * K * 2 + B * D * 2 + B * K * 4 + K * 4)
        return pl.pallas_call(
            ensemble_mean_kernel,
            out_shape=jax.ShapeDtypeStruct((B, K), jnp.float32),
            in_specs=[vspec, vspec, vspec],
            out_specs=vspec,
            cost_estimate=cost,
        )(x_flat, params["w_mean"], params["b_mean"])

    elif mode == "ind":
        cost = pl.CostEstimate(
            flops=2 * B * D * M * K, transcendentals=0,
            bytes_accessed=D * M * K * 2 + B * D * 2 + M * B * K * 4 + M * K * 4)
        return pl.pallas_call(
            ensemble_ind_kernel,
            out_shape=jax.ShapeDtypeStruct((M, B, K), jnp.float32),
            in_specs=[vspec, vspec, vspec],
            out_specs=vspec,
            cost_estimate=cost,
        )(x_flat, params["w_folded"], params["b"])

    elif mode == "both":
        cost = pl.CostEstimate(
            flops=2 * B * D * M * K, transcendentals=0,
            bytes_accessed=D * M * K * 2 + B * D * 2 + (M + 1) * B * K * 4 + M * K * 4)
        return pl.pallas_call(
            ensemble_both_kernel,
            out_shape=(jax.ShapeDtypeStruct((B, K), jnp.float32),
                       jax.ShapeDtypeStruct((M, B, K), jnp.float32)),
            in_specs=[vspec, vspec, vspec],
            out_specs=(vspec, vspec),
            cost_estimate=cost,
        )(x_flat, params["w_folded"], params["b"])

    else:
        raise NotImplementedError


if __name__ == "__main__":
    key = jax.random.PRNGKey(0)
    B, C, H, W = 2, 4, 16, 16
    M, K = 3, 128
    D = C * H * W

    kx, kw, kb = jax.random.split(key, 3)
    x = jax.random.normal(kx, (B, C, H, W), dtype=jnp.float32)
    weights = jax.random.normal(kw, (M, D, K), dtype=jnp.float32) * 0.02
    biases = jax.random.normal(kb, (M, K), dtype=jnp.float32) * 0.01

    params = prepare_ensemble(weights, biases)          # one-time init fold

    # Fused path: both outputs from a single weight stream.
    mean_both, ind_both = jax.block_until_ready(ensemble_forward(params, x, mode="both"))
    # Standalone paths.
    out_mean = jax.block_until_ready(ensemble_forward(params, x, mode="mean"))
    out_ind = jax.block_until_ready(ensemble_forward(params, x, mode="ind"))

    # ------------------------------------------------------------------
    # References (plain JAX).  The kernels stream x/W as bf16 with f32
    # accumulation, so references use the same bf16-rounded inputs; remaining
    # diffs are f32 accumulation-order noise.  NOTE: this is ~1e-3 relative off
    # the true f32 PyTorch EnsembleModel — accepted, documented tradeoff.
    # ------------------------------------------------------------------
    x_bf = x.reshape(B, D).astype(jnp.bfloat16).astype(jnp.float32)
    w_bf = weights.astype(jnp.bfloat16).astype(jnp.float32)
    per_model_ref = jnp.stack(
        [x_bf @ w_bf[m] + biases[m] for m in range(M)], axis=0)          # (M, B, K)
    mean_ref_ind = jnp.mean(per_model_ref, axis=0)                        # (B, K)
    # Pre-reduced-weight mean reference (matches the standalone 'mean' kernel).
    w_mean_bf = jnp.mean(weights, axis=0).astype(jnp.bfloat16).astype(jnp.float32)
    mean_ref_pre = x_bf @ w_mean_bf + jnp.mean(biases, axis=0)            # (B, K)

    assert out_mean.shape == (B, K)
    assert out_ind.shape == (M, B, K)
    assert mean_both.shape == (B, K)
    assert ind_both.shape == (M, B, K)
    assert jnp.allclose(out_ind, per_model_ref, atol=1e-3, rtol=1e-3)
    assert jnp.allclose(ind_both, per_model_ref, atol=1e-3, rtol=1e-3)
    assert jnp.allclose(mean_both, mean_ref_ind, atol=1e-3, rtol=1e-3)
    assert jnp.allclose(out_mean, mean_ref_pre, atol=1e-3, rtol=1e-3)
    # The two mean formulations agree up to bf16-rounding-order noise.
    assert jnp.allclose(out_mean, mean_ref_ind, atol=3e-3, rtol=3e-3)

    print("KERNEL_OK")
</pallas_src>

<mosaic_0001>
module attributes {stable_mosaic.version = 11 : i64} {
  func.func @ensemble_both_kernel(%arg0: memref<2x1024xbf16, #tpu.memory_space<vmem>>, %arg1: memref<1024x384xbf16, #tpu.memory_space<vmem>>, %arg2: memref<3x128xf32, #tpu.memory_space<vmem>>, %arg3: memref<2x128xf32, #tpu.memory_space<vmem>>, %arg4: memref<3x2x128xf32, #tpu.memory_space<vmem>>) attributes {dimension_semantics = [], scalar_prefetch = 0 : i64, scratch_operands = 0 : i64, tpu.core_type = #tpu.core_type<tc>} {
    %c0 = arith.constant 0 : index
    %c0_0 = arith.constant 0 : index
    %0 = vector.load %arg0[%c0, %c0_0] : memref<2x1024xbf16, #tpu.memory_space<vmem>>, vector<2x1024xbf16>
    %c0_1 = arith.constant 0 : index
    %c0_2 = arith.constant 0 : index
    %1 = vector.load %arg1[%c0_1, %c0_2] : memref<1024x384xbf16, #tpu.memory_space<vmem>>, vector<1024x384xbf16>
    %cst = arith.constant dense<0.000000e+00> : vector<2x384xf32>
    %2 = tpu.matmul %0, %1, %cst {dimension_numbers = #tpu.dot_dimension_numbers<[1], [0], [0], [1], [0, 0, 1, 1], [], []>} : vector<2x1024xbf16>, vector<1024x384xbf16>, vector<2x384xf32> -> vector<2x384xf32>
    %3 = vector.extract_strided_slice %2 {offsets = [0, 0], sizes = [2, 128], strides = [1, 1]} : vector<2x384xf32> to vector<2x128xf32>
    %4 = vector.extract_strided_slice %2 {offsets = [0, 0], sizes = [2, 128], strides = [1, 1]} : vector<2x384xf32> to vector<2x128xf32>
    %c0_3 = arith.constant 0 : index
    %c0_4 = arith.constant 0 : index
    %5 = vector.load %arg2[%c0_3, %c0_4] : memref<3x128xf32, #tpu.memory_space<vmem>>, vector<1x128xf32>
    %6 = vector.broadcast %5 : vector<1x128xf32> to vector<2x128xf32>
    %7 = arith.addf %4, %6 : vector<2x128xf32>
    %c0_5 = arith.constant 0 : index
    %c0_6 = arith.constant 0 : index
    %c0_7 = arith.constant 0 : index
    %8 = vector.load %arg4[%c0_5, %c0_6, %c0_7] : memref<3x2x128xf32, #tpu.memory_space<vmem>>, vector<1x2x128xf32>
    %9 = vector.shape_cast %8 : vector<1x2x128xf32> to vector<2x128xf32>
    %10 = vector.shape_cast %7 : vector<2x128xf32> to vector<1x2x128xf32>
    tpu.vector_store %arg4[%c0_5, %c0_6, %c0_7], %10 {strides = array<i32>} : memref<3x2x128xf32, #tpu.memory_space<vmem>>, vector<1x2x128xf32>,
    %11 = vector.extract_strided_slice %2 {offsets = [0, 128], sizes = [2, 128], strides = [1, 1]} : vector<2x384xf32> to vector<2x128xf32>
    %12 = arith.addf %3, %11 : vector<2x128xf32>
    %c1 = arith.constant 1 : index
    %c0_8 = arith.constant 0 : index
    %13 = vector.load %arg2[%c1, %c0_8] : memref<3x128xf32, #tpu.memory_space<vmem>>, vector<1x128xf32>
    %14 = vector.broadcast %13 : vector<1x128xf32> to vector<2x128xf32>
    %15 = arith.addf %11, %14 : vector<2x128xf32>
    %c1_9 = arith.constant 1 : index
    %c0_10 = arith.constant 0 : index
    %c0_11 = arith.constant 0 : index
    %16 = vector.load %arg4[%c1_9, %c0_10, %c0_11] : memref<3x2x128xf32, #tpu.memory_space<vmem>>, vector<1x2x128xf32>
    %17 = vector.shape_cast %16 : vector<1x2x128xf32> to vector<2x128xf32>
    %18 = vector.shape_cast %15 : vector<2x128xf32> to vector<1x2x128xf32>
    tpu.vector_store %arg4[%c1_9, %c0_10, %c0_11], %18 {strides = array<i32>} : memref<3x2x128xf32, #tpu.memory_space<vmem>>, vector<1x2x128xf32>,
    %19 = vector.extract_strided_slice %2 {offsets = [0, 256], sizes = [2, 128], strides = [1, 1]} : vector<2x384xf32> to vector<2x128xf32>
    %20 = arith.addf %12, %19 : vector<2x128xf32>
    %c2 = arith.constant 2 : index
    %c0_12 = arith.constant 0 : index
    %21 = vector.load %arg2[%c2, %c0_12] : memref<3x128xf32, #tpu.memory_space<vmem>>, vector<1x128xf32>
    %22 = vector.broadcast %21 : vector<1x128xf32> to vector<2x128xf32>
    %23 = arith.addf %19, %22 : vector<2x128xf32>
    %c2_13 = arith.constant 2 : index
    %c0_14 = arith.constant 0 : index
    %c0_15 = arith.constant 0 : index
    %24 = vector.load %arg4[%c2_13, %c0_14, %c0_15] : memref<3x2x128xf32, #tpu.memory_space<vmem>>, vector<1x2x128xf32>
    %25 = vector.shape_cast %24 : vector<1x2x128xf32> to vector<2x128xf32>
    %26 = vector.shape_cast %23 : vector<2x128xf32> to vector<1x2x128xf32>
    tpu.vector_store %arg4[%c2_13, %c0_14, %c0_15], %26 {strides = array<i32>} : memref<3x2x128xf32, #tpu.memory_space<vmem>>, vector<1x2x128xf32>,
    %c0_16 = arith.constant 0 : index
    %c0_17 = arith.constant 0 : index
    %27 = vector.load %arg2[%c0_16, %c0_17] : memref<3x128xf32, #tpu.memory_space<vmem>>, vector<3x128xf32>
    %cst_18 = arith.constant dense<0.000000e+00> : vector<128xf32>
    %28 = vector.multi_reduction <add>, %27, %cst_18 [0] : vector<3x128xf32> to vector<128xf32>
    %29 = vector.shape_cast %28 : vector<128xf32> to vector<1x128xf32>
    %30 = vector.broadcast %29 : vector<1x128xf32> to vector<2x128xf32>
    %31 = arith.addf %20, %30 : vector<2x128xf32>
    %cst_19 = arith.constant 0.333333343 : f32
    %32 = vector.broadcast %cst_19 : f32 to vector<2x128xf32>
    %33 = arith.mulf %31, %32 : vector<2x128xf32>
    %c0_20 = arith.constant 0 : index
    %c0_21 = arith.constant 0 : index
    %34 = vector.load %arg3[%c0_20, %c0_21] : memref<2x128xf32, #tpu.memory_space<vmem>>, vector<2x128xf32>
    tpu.vector_store %arg3[%c0_20, %c0_21], %33 {strides = array<i32>} : memref<2x128xf32, #tpu.memory_space<vmem>>, vector<2x128xf32>,
    return
  }
}

</mosaic_0001>

<llo_original>
// kernel: tpu_custom_call.1
$region0: #{tpu_custom_call.1}
  #allocation0 [shape = 'u32[]', space=smem, size = 0x4, offset = 0x4, fixed_abs, tag = 'smem constant byte address 0x4 - core index']
  #allocation1 [shape = 'u32[144,128]{1,0:T(1,128)}', space=vmem, size = 0x12000, scoped, tag = 'internal scratch']
  %s0 = inlined_call_operand.hbm [shape: bf16[2,1024], index: 0, kind: input, shape index: {}]
  %s1 = inlined_call_operand.hbm [shape: bf16[1024,384], index: 1, kind: input, shape index: {}]
  %s2 = inlined_call_operand.vmem [shape: f32[3,128], index: 2, kind: input, shape index: {}]
  %s3 = inlined_call_operand.hbm [shape: f32[2,128], index: 3, kind: output, shape index: {0}]
  %s4 = inlined_call_operand.hbm [shape: f32[3,2,128], index: 4, kind: output, shape index: {1}]
  %5 = xla_tuple %s3, %s4
  %s6 = sld [smem:[#allocation0]]
  $region38: #{tpu_custom_call.1} parent=0
    _
  %s8 = ssub.s32 1, %s6
  %s9 = scalar_select 0, %s8, %s6
  $region1: #{tpu_custom_call.1} parent=0
    #allocation2 [shape = 'u8[4096]{0}', space=vmem, size = 0x1000, scoped, tag = 'input window, operand 0, single buffered']
    #allocation3 [shape = 's32[1]{0}', space=sflag, size = 0x4, scoped, tag = 'scoped memory for tpu_custom_call.1']
    #allocation4 [shape = 's32[1]{0}', space=sflag, size = 0x4, scoped, tag = 'scoped memory for tpu_custom_call.1']
    #allocation5 [shape = 'u8[786432]{0}', space=vmem, size = 0xc0000, scoped, tag = 'input window, operand 1, single buffered']
    #allocation6 [shape = 's32[1]{0}', space=sflag, size = 0x4, scoped, tag = 'scoped memory for tpu_custom_call.1']
    #allocation7 [shape = 'u8[1024]{0}', space=vmem, size = 0x400, scoped, tag = 'output window, operand 0, single buffered']
    #allocation8 [shape = 'u8[3072]{0}', space=vmem, size = 0xc00, scoped, tag = 'output window, operand 1, single buffered']
    #allocation9 [shape = 's32[1]{0}', space=sflag, size = 0x4, scoped, tag = 'scoped memory for tpu_custom_call.1']
    %10 = vsyncpa [#allocation3], 0
    %11 = vsyncpa [#allocation6], 0
    %12 = vsyncpa [#allocation4], 0
    %13 = vsyncpa [#allocation9], 0
    // Predicated region
    $region2: #{tpu_custom_call.1} parent=1 // pred_check
      _
    $region3: #{tpu_custom_call.1} parent=1 // pred_check_branch
      %15 = sbr.rel (0) target = $region5
    $region4: #{tpu_custom_call.1} parent=1 // pred_region
      %s17 = ssub.s32 128, 128
      %18 = vsyncadd [#allocation3], %s17
      %s20 = sshll.u32 [#allocation2], 4
      %s21 = int_to_ptr.vmem [resolvable:$true] %s20
      %23 = dma.hbm_to_vmem [thread:$0]  %s0, 128, %s21, [#allocation3]
    $region5: #{tpu_custom_call.1} parent=1 // pred_fallthru
      _
    // Predicated region
    $region6: #{tpu_custom_call.1} parent=1 // pred_check
      _
    $region7: #{tpu_custom_call.1} parent=1 // pred_check_branch
      %25 = sbr.rel (0) target = $region9
    $region8: #{tpu_custom_call.1} parent=1 // pred_region
      %s27 = ssub.s32 24576, 24576
      %28 = vsyncadd [#allocation6], %s27
      %s29 = sshll.u32 [#allocation5], 4
      %s30 = int_to_ptr.vmem [resolvable:$true] %s29
      %35 = dma.hbm_to_vmem [thread:$0]  %s1, 24576, %s30, [#allocation6], 192, 192, 12
    $region9: #{tpu_custom_call.1} parent=1 // pred_fallthru
      _
    // Predicated region
    $region10: #{tpu_custom_call.1} parent=1 // pred_check
      _
    $region11: #{tpu_custom_call.1} parent=1 // pred_check_branch
      %37 = sbr.rel (0) target = $region13
    $region12: #{tpu_custom_call.1} parent=1 // pred_region
      _
    $region13: #{tpu_custom_call.1} parent=1 // pred_fallthru
      _
    // Predicated region
    $region14: #{tpu_custom_call.1} parent=1 // pred_check
      _
    $region15: #{tpu_custom_call.1} parent=1 // pred_check_branch
      %39 = sbr.rel (0) target = $region17
    $region16: #{tpu_custom_call.1} parent=1 // pred_region
      %40 = dma.done [#allocation3], 128
    $region17: #{tpu_custom_call.1} parent=1 // pred_fallthru
      _
    // Predicated region
    $region18: #{tpu_custom_call.1} parent=1 // pred_check
      _
    $region19: #{tpu_custom_call.1} parent=1 // pred_check_branch
      %42 = sbr.rel (0) target = $region21
    $region20: #{tpu_custom_call.1} parent=1 // pred_region
      %43 = dma.done [#allocation6], 24576
    $region21: #{tpu_custom_call.1} parent=1 // pred_fallthru
      _
    %v45 = vld [vmem:[#allocation2] sm:$0xff]
    %v46 = vld [vmem:[#allocation5] sm:$0xff]
    %v47 = vld [vmem:[#allocation5 + $0x8] sm:$0xf]
    %v48 = vld [vmem:[#allocation5 + $0xc] sm:$0xff]
    %v49 = vld [vmem:[#allocation5 + $0x14] sm:$0xf]
    %v50 = vld [vmem:[#allocation5 + $0x18] sm:$0xff]
    %v51 = vld [vmem:[#allocation5 + $0x20] sm:$0xf]
    %v52 = vld [vmem:[#allocation5 + $0x24] sm:$0xff]
    %v53 = vld [vmem:[#allocation5 + $0x2c] sm:$0xf]
    %v54 = vld [vmem:[#allocation5 + $0x30] sm:$0xff]
    %v55 = vld [vmem:[#allocation5 + $0x38] sm:$0xf]
    %v56 = vld [vmem:[#allocation5 + $0x3c] sm:$0xff]
    %v57 = vld [vmem:[#allocation5 + $0x44] sm:$0xf]
    %v58 = vld [vmem:[#allocation5 + $0x48] sm:$0xff]
    %v59 = vld [vmem:[#allocation5 + $0x50] sm:$0xf]
    %v60 = vld [vmem:[#allocation5 + $0x54] sm:$0xff]
    %v61 = vld [vmem:[#allocation5 + $0x5c] sm:$0xf]
    %v62 = vld [vmem:[#allocation5 + $0x60] sm:$0xff]
    %v63 = vld [vmem:[#allocation5 + $0x68] sm:$0xf]
    %v64 = vld [vmem:[#allocation5 + $0x6c] sm:$0xff]
    %v65 = vld [vmem:[#allocation5 + $0x74] sm:$0xf]
    %v66 = vld [vmem:[#allocation5 + $0x78] sm:$0xff]
    %v67 = vld [vmem:[#allocation5 + $0x80] sm:$0xf]
    %v68 = vld [vmem:[#allocation5 + $0x84] sm:$0xff]
    %v69 = vld [vmem:[#allocation5 + $0x8c] sm:$0xf]
    %v70 = vld [vmem:[#allocation5 + $0x90] sm:$0xff]
    %v71 = vld [vmem:[#allocation5 + $0x98] sm:$0xf]
    %v72 = vld [vmem:[#allocation5 + $0x9c] sm:$0xff]
    %v73 = vld [vmem:[#allocation5 + $0xa4] sm:$0xf]
    %v74 = vld [vmem:[#allocation5 + $0xa8] sm:$0xff]
    %v75 = vld [vmem:[#allocation5 + $0xb0] sm:$0xf]
    %v76 = vld [vmem:[#allocation5 + $0xb4] sm:$0xff]
    %v77 = vld [vmem:[#allocation5 + $0xbc] sm:$0xf]
    %v78 = vld [vmem:[#allocation5 + $0xc0] sm:$0xff]
    %v79 = vld [vmem:[#allocation5 + $0xc8] sm:$0xf]
    %v80 = vld [vmem:[#allocation5 + $0xcc] sm:$0xff]
    %v81 = vld [vmem:[#allocation5 + $0xd4] sm:$0xf]
    %v82 = vld [vmem:[#allocation5 + $0xd8] sm:$0xff]
    %v83 = vld [vmem:[#allocation5 + $0xe0] sm:$0xf]
    %v84 = vld [vmem:[#allocation5 + $0xe4] sm:$0xff]
    %v85 = vld [vmem:[#allocation5 + $0xec] sm:$0xf]
    %v86 = vld [vmem:[#allocation5 + $0xf0] sm:$0xff]
    %v87 = vld [vmem:[#allocation5 + $0xf8] sm:$0xf]
    %v88 = vld [vmem:[#allocation5 + $0xfc] sm:$0xff]
    %v89 = vld [vmem:[#allocation5 + $0x104] sm:$0xf]
    %v90 = vld [vmem:[#allocation5 + $0x108] sm:$0xff]
    %v91 = vld [vmem:[#allocation5 + $0x110] sm:$0xf]
    %v92 = vld [vmem:[#allocation5 + $0x114] sm:$0xff]
    %v93 = vld [vmem:[#allocation5 + $0x11c] sm:$0xf]
    %v94 = vld [vmem:[#allocation5 + $0x120] sm:$0xff]
    %v95 = vld [vmem:[#allocation5 + $0x128] sm:$0xf]
    %v96 = vld [vmem:[#allocation5 + $0x12c] sm:$0xff]
    %v97 = vld [vmem:[#allocation5 + $0x134] sm:$0xf]
    %v98 = vld [vmem:[#allocation5 + $0x138] sm:$0xff]
    %v99 = vld [vmem:[#allocation5 + $0x140] sm:$0xf]
    %v100 = vld [vmem:[#allocation5 + $0x144] sm:$0xff]
    %v101 = vld [vmem:[#allocation5 + $0x14c] sm:$0xf]
    %v102 = vld [vmem:[#allocation5 + $0x150] sm:$0xff]
    %v103 = vld [vmem:[#allocation5 + $0x158] sm:$0xf]
    %v104 = vld [vmem:[#allocation5 + $0x15c] sm:$0xff]
    %v105 = vld [vmem:[#allocation5 + $0x164] sm:$0xf]
    %v106 = vld [vmem:[#allocation5 + $0x168] sm:$0xff]
    %v107 = vld [vmem:[#allocation5 + $0x170] sm:$0xf]
    %v108 = vld [vmem:[#allocation5 + $0x174] sm:$0xff]
    %v109 = vld [vmem:[#allocation5 + $0x17c] sm:$0xf]
    %v110 = vld [vmem:[#allocation5 + $0x180] sm:$0xff]
    %v111 = vld [vmem:[#allocation5 + $0x188] sm:$0xf]
    %v112 = vld [vmem:[#allocation5 + $0x18c] sm:$0xff]
    %v113 = vld [vmem:[#allocation5 + $0x194] sm:$0xf]
    %v114 = vld [vmem:[#allocation5 + $0x198] sm:$0xff]
    %v115 = vld [vmem:[#allocation5 + $0x1a0] sm:$0xf]
    %v116 = vld [vmem:[#allocation5 + $0x1a4] sm:$0xff]
    %v117 = vld [vmem:[#allocation5 + $0x1ac] sm:$0xf]
    %v118 = vld [vmem:[#allocation5 + $0x1b0] sm:$0xff]
    %v119 = vld [vmem:[#allocation5 + $0x1b8] sm:$0xf]
    %v120 = vld [vmem:[#allocation5 + $0x1bc] sm:$0xff]
    %v121 = vld [vmem:[#allocation5 + $0x1c4] sm:$0xf]
    %v122 = vld [vmem:[#allocation5 + $0x1c8] sm:$0xff]
    %v123 = vld [vmem:[#allocation5 + $0x1d0] sm:$0xf]
    %v124 = vld [vmem:[#allocation5 + $0x1d4] sm:$0xff]
    %v125 = vld [vmem:[#allocation5 + $0x1dc] sm:$0xf]
    %v126 = vld [vmem:[#allocation5 + $0x1e0] sm:$0xff]
    %v127 = vld [vmem:[#allocation5 + $0x1e8] sm:$0xf]
    %v128 = vld [vmem:[#allocation5 + $0x1ec] sm:$0xff]
    %v129 = vld [vmem:[#allocation5 + $0x1f4] sm:$0xf]
    %v130 = vld [vmem:[#allocation5 + $0x1f8] sm:$0xff]
    %v131 = vld [vmem:[#allocation5 + $0x200] sm:$0xf]
    %v132 = vld [vmem:[#allocation5 + $0x204] sm:$0xff]
    %v133 = vld [vmem:[#allocation5 + $0x20c] sm:$0xf]
    %v134 = vld [vmem:[#allocation5 + $0x210] sm:$0xff]
    %v135 = vld [vmem:[#allocation5 + $0x218] sm:$0xf]
    %v136 = vld [vmem:[#allocation5 + $0x21c] sm:$0xff]
    %v137 = vld [vmem:[#allocation5 + $0x224] sm:$0xf]
    %v138 = vld [vmem:[#allocation5 + $0x228] sm:$0xff]
    %v139 = vld [vmem:[#allocation5 + $0x230] sm:$0xf]
    %v140 = vld [vmem:[#allocation5 + $0x234] sm:$0xff]
    %v141 = vld [vmem:[#allocation5 + $0x23c] sm:$0xf]
    %v142 = vld [vmem:[#allocation5 + $0x240] sm:$0xff]
    %v143 = vld [vmem:[#allocation5 + $0x248] sm:$0xf]
    %v144 = vld [vmem:[#allocation5 + $0x24c] sm:$0xff]
    %v145 = vld [vmem:[#allocation5 + $0x254] sm:$0xf]
    %v146 = vld [vmem:[#allocation5 + $0x258] sm:$0xff]
    %v147 = vld [vmem:[#allocation5 + $0x260] sm:$0xf]
    %v148 = vld [vmem:[#allocation5 + $0x264] sm:$0xff]
    %v149 = vld [vmem:[#allocation5 + $0x26c] sm:$0xf]
    %v150 = vld [vmem:[#allocation5 + $0x270] sm:$0xff]
    %v151 = vld [vmem:[#allocation5 + $0x278] sm:$0xf]
    %v152 = vld [vmem:[#allocation5 + $0x27c] sm:$0xff]
    %v153 = vld [vmem:[#allocation5 + $0x284] sm:$0xf]
    %v154 = vld [vmem:[#allocation5 + $0x288] sm:$0xff]
    %v155 = vld [vmem:[#allocation5 + $0x290] sm:$0xf]
    %v156 = vld [vmem:[#allocation5 + $0x294] sm:$0xff]
    %v157 = vld [vmem:[#allocation5 + $0x29c] sm:$0xf]
    %v158 = vld [vmem:[#allocation5 + $0x2a0] sm:$0xff]
    %v159 = vld [vmem:[#allocation5 + $0x2a8] sm:$0xf]
    %v160 = vld [vmem:[#allocation5 + $0x2ac] sm:$0xff]
    %v161 = vld [vmem:[#allocation5 + $0x2b4] sm:$0xf]
    %v162 = vld [vmem:[#allocation5 + $0x2b8] sm:$0xff]
    %v163 = vld [vmem:[#allocation5 + $0x2c0] sm:$0xf]
    %v164 = vld [vmem:[#allocation5 + $0x2c4] sm:$0xff]
    %v165 = vld [vmem:[#allocation5 + $0x2cc] sm:$0xf]
    %v166 = vld [vmem:[#allocation5 + $0x2d0] sm:$0xff]
    %v167 = vld [vmem:[#allocation5 + $0x2d8] sm:$0xf]
    %v168 = vld [vmem:[#allocation5 + $0x2dc] sm:$0xff]
    %v169 = vld [vmem:[#allocation5 + $0x2e4] sm:$0xf]
    %v170 = vld [vmem:[#allocation5 + $0x2e8] sm:$0xff]
    %v171 = vld [vmem:[#allocation5 + $0x2f0] sm:$0xf]
    %v172 = vld [vmem:[#allocation5 + $0x2f4] sm:$0xff]
    %v173 = vld [vmem:[#allocation5 + $0x2fc] sm:$0xf]
    %v174 = vld [vmem:[#allocation5 + $0x300] sm:$0xff]
    %v175 = vld [vmem:[#allocation5 + $0x308] sm:$0xf]
    %v176 = vld [vmem:[#allocation5 + $0x30c] sm:$0xff]
    %v177 = vld [vmem:[#allocation5 + $0x314] sm:$0xf]
    %v178 = vld [vmem:[#allocation5 + $0x318] sm:$0xff]
    %v179 = vld [vmem:[#allocation5 + $0x320] sm:$0xf]
    %v180 = vld [vmem:[#allocation5 + $0x324] sm:$0xff]
    %v181 = vld [vmem:[#allocation5 + $0x32c] sm:$0xf]
    %v182 = vld [vmem:[#allocation5 + $0x330] sm:$0xff]
    %v183 = vld [vmem:[#allocation5 + $0x338] sm:$0xf]
    %v184 = vld [vmem:[#allocation5 + $0x33c] sm:$0xff]
    %v185 = vld [vmem:[#allocation5 + $0x344] sm:$0xf]
    %v186 = vld [vmem:[#allocation5 + $0x348] sm:$0xff]
    %v187 = vld [vmem:[#allocation5 + $0x350] sm:$0xf]
    %v188 = vld [vmem:[#allocation5 + $0x354] sm:$0xff]
    %v189 = vld [vmem:[#allocation5 + $0x35c] sm:$0xf]
    %v190 = vld [vmem:[#allocation5 + $0x360] sm:$0xff]
    %v191 = vld [vmem:[#allocation5 + $0x368] sm:$0xf]
    %v192 = vld [vmem:[#allocation5 + $0x36c] sm:$0xff]
    %v193 = vld [vmem:[#allocation5 + $0x374] sm:$0xf]
    %v194 = vld [vmem:[#allocation5 + $0x378] sm:$0xff]
    %v195 = vld [vmem:[#allocation5 + $0x380] sm:$0xf]
    %v196 = vld [vmem:[#allocation5 + $0x384] sm:$0xff]
    %v197 = vld [vmem:[#allocation5 + $0x38c] sm:$0xf]
    %v198 = vld [vmem:[#allocation5 + $0x390] sm:$0xff]
    %v199 = vld [vmem:[#allocation5 + $0x398] sm:$0xf]
    %v200 = vld [vmem:[#allocation5 + $0x39c] sm:$0xff]
    %v201 = vld [vmem:[#allocation5 + $0x3a4] sm:$0xf]
    %v202 = vld [vmem:[#allocation5 + $0x3a8] sm:$0xff]
    %v203 = vld [vmem:[#allocation5 + $0x3b0] sm:$0xf]
    %v204 = vld [vmem:[#allocation5 + $0x3b4] sm:$0xff]
    %v205 = vld [vmem:[#allocation5 + $0x3bc] sm:$0xf]
    %v206 = vld [vmem:[#allocation5 + $0x3c0] sm:$0xff]
    %v207 = vld [vmem:[#allocation5 + $0x3c8] sm:$0xf]
    %v208 = vld [vmem:[#allocation5 + $0x3cc] sm:$0xff]
    %v209 = vld [vmem:[#allocation5 + $0x3d4] sm:$0xf]
    %v210 = vld [vmem:[#allocation5 + $0x3d8] sm:$0xff]
    %v211 = vld [vmem:[#allocation5 + $0x3e0] sm:$0xf]
    %v212 = vld [vmem:[#allocation5 + $0x3e4] sm:$0xff]
    %v213 = vld [vmem:[#allocation5 + $0x3ec] sm:$0xf]
    %v214 = vld [vmem:[#allocation5 + $0x3f0] sm:$0xff]
    %v215 = vld [vmem:[#allocation5 + $0x3f8] sm:$0xf]
    %v216 = vld [vmem:[#allocation5 + $0x3fc] sm:$0xff]
    %v217 = vld [vmem:[#allocation5 + $0x404] sm:$0xf]
    %v218 = vld [vmem:[#allocation5 + $0x408] sm:$0xff]
    %v219 = vld [vmem:[#allocation5 + $0x410] sm:$0xf]
    %v220 = vld [vmem:[#allocation5 + $0x414] sm:$0xff]
    %v221 = vld [vmem:[#allocation5 + $0x41c] sm:$0xf]
    %v222 = vld [vmem:[#allocation5 + $0x420] sm:$0xff]
    %v223 = vld [vmem:[#allocation5 + $0x428] sm:$0xf]
    %v224 = vld [vmem:[#allocation5 + $0x42c] sm:$0xff]
    %v225 = vld [vmem:[#allocation5 + $0x434] sm:$0xf]
    %v226 = vld [vmem:[#allocation5 + $0x438] sm:$0xff]
    %v227 = vld [vmem:[#allocation5 + $0x440] sm:$0xf]
    %v228 = vld [vmem:[#allocation5 + $0x444] sm:$0xff]
    %v229 = vld [vmem:[#allocation5 + $0x44c] sm:$0xf]
    %v230 = vld [vmem:[#allocation5 + $0x450] sm:$0xff]
    %v231 = vld [vmem:[#allocation5 + $0x458] sm:$0xf]
    %v232 = vld [vmem:[#allocation5 + $0x45c] sm:$0xff]
    %v233 = vld [vmem:[#allocation5 + $0x464] sm:$0xf]
    %v234 = vld [vmem:[#allocation5 + $0x468] sm:$0xff]
    %v235 = vld [vmem:[#allocation5 + $0x470] sm:$0xf]
    %v236 = vld [vmem:[#allocation5 + $0x474] sm:$0xff]
    %v237 = vld [vmem:[#allocation5 + $0x47c] sm:$0xf]
    %v238 = vld [vmem:[#allocation5 + $0x480] sm:$0xff]
    %v239 = vld [vmem:[#allocation5 + $0x488] sm:$0xf]
    %v240 = vld [vmem:[#allocation5 + $0x48c] sm:$0xff]
    %v241 = vld [vmem:[#allocation5 + $0x494] sm:$0xf]
    %v242 = vld [vmem:[#allocation5 + $0x498] sm:$0xff]
    %v243 = vld [vmem:[#allocation5 + $0x4a0] sm:$0xf]
    %v244 = vld [vmem:[#allocation5 + $0x4a4] sm:$0xff]
    %v245 = vld [vmem:[#allocation5 + $0x4ac] sm:$0xf]
    %v246 = vld [vmem:[#allocation5 + $0x4b0] sm:$0xff]
    %v247 = vld [vmem:[#allocation5 + $0x4b8] sm:$0xf]
    %v248 = vld [vmem:[#allocation5 + $0x4bc] sm:$0xff]
    %v249 = vld [vmem:[#allocation5 + $0x4c4] sm:$0xf]
    %v250 = vld [vmem:[#allocation5 + $0x4c8] sm:$0xff]
    %v251 = vld [vmem:[#allocation5 + $0x4d0] sm:$0xf]
    %v252 = vld [vmem:[#allocation5 + $0x4d4] sm:$0xff]
    %v253 = vld [vmem:[#allocation5 + $0x4dc] sm:$0xf]
    %v254 = vld [vmem:[#allocation5 + $0x4e0] sm:$0xff]
    %v255 = vld [vmem:[#allocation5 + $0x4e8] sm:$0xf]
    %v256 = vld [vmem:[#allocation5 + $0x4ec] sm:$0xff]
    %v257 = vld [vmem:[#allocation5 + $0x4f4] sm:$0xf]
    %v258 = vld [vmem:[#allocation5 + $0x4f8] sm:$0xff]
    %v259 = vld [vmem:[#allocation5 + $0x500] sm:$0xf]
    %v260 = vld [vmem:[#allocation5 + $0x504] sm:$0xff]
    %v261 = vld [vmem:[#allocation5 + $0x50c] sm:$0xf]
    %v262 = vld [vmem:[#allocation5 + $0x510] sm:$0xff]
    %v263 = vld [vmem:[#allocation5 + $0x518] sm:$0xf]
    %v264 = vld [vmem:[#allocation5 + $0x51c] sm:$0xff]
    %v265 = vld [vmem:[#allocation5 + $0x524] sm:$0xf]
    %v266 = vld [vmem:[#allocation5 + $0x528] sm:$0xff]
    %v267 = vld [vmem:[#allocation5 + $0x530] sm:$0xf]
    %v268 = vld [vmem:[#allocation5 + $0x534] sm:$0xff]
    %v269 = vld [vmem:[#allocation5 + $0x53c] sm:$0xf]
    %v270 = vld [vmem:[#allocation5 + $0x540] sm:$0xff]
    %v271 = vld [vmem:[#allocation5 + $0x548] sm:$0xf]
    %v272 = vld [vmem:[#allocation5 + $0x54c] sm:$0xff]
    %v273 = vld [vmem:[#allocation5 + $0x554] sm:$0xf]
    %v274 = vld [vmem:[#allocation5 + $0x558] sm:$0xff]
    %v275 = vld [vmem:[#allocation5 + $0x560] sm:$0xf]
    %v276 = vld [vmem:[#allocation5 + $0x564] sm:$0xff]
    %v277 = vld [vmem:[#allocation5 + $0x56c] sm:$0xf]
    %v278 = vld [vmem:[#allocation5 + $0x570] sm:$0xff]
    %v279 = vld [vmem:[#allocation5 + $0x578] sm:$0xf]
    %v280 = vld [vmem:[#allocation5 + $0x57c] sm:$0xff]
    %v281 = vld [vmem:[#allocation5 + $0x584] sm:$0xf]
    %v282 = vld [vmem:[#allocation5 + $0x588] sm:$0xff]
    %v283 = vld [vmem:[#allocation5 + $0x590] sm:$0xf]
    %v284 = vld [vmem:[#allocation5 + $0x594] sm:$0xff]
    %v285 = vld [vmem:[#allocation5 + $0x59c] sm:$0xf]
    %v286 = vld [vmem:[#allocation5 + $0x5a0] sm:$0xff]
    %v287 = vld [vmem:[#allocation5 + $0x5a8] sm:$0xf]
    %v288 = vld [vmem:[#allocation5 + $0x5ac] sm:$0xff]
    %v289 = vld [vmem:[#allocation5 + $0x5b4] sm:$0xf]
    %v290 = vld [vmem:[#allocation5 + $0x5b8] sm:$0xff]
    %v291 = vld [vmem:[#allocation5 + $0x5c0] sm:$0xf]
    %v292 = vld [vmem:[#allocation5 + $0x5c4] sm:$0xff]
    %v293 = vld [vmem:[#allocation5 + $0x5cc] sm:$0xf]
    %v294 = vld [vmem:[#allocation5 + $0x5d0] sm:$0xff]
    %v295 = vld [vmem:[#allocation5 + $0x5d8] sm:$0xf]
    %v296 = vld [vmem:[#allocation5 + $0x5dc] sm:$0xff]
    %v297 = vld [vmem:[#allocation5 + $0x5e4] sm:$0xf]
    %v298 = vld [vmem:[#allocation5 + $0x5e8] sm:$0xff]
    %v299 = vld [vmem:[#allocation5 + $0x5f0] sm:$0xf]
    %v300 = vld [vmem:[#allocation5 + $0x5f4] sm:$0xff]
    %v301 = vld [vmem:[#allocation5 + $0x5fc] sm:$0xf]
    %v303 = vcombine.high %v45, %v45
    %v305 = vunpack.c.l.s4 1966171168
    %v306 = vunpack.c.0.s8 %v305
    %v307 = vlaneseq
    %v308 = vshrl.u32 %v307, 7
    %v309 = vsub.s32 %v306, %v308
    %v310 = vrot.slane %v45, %v309
    %v312 = vunpack.c.l.s4 1966171168
    %v313 = vunpack.c.0.s8 %v312
    %v314 = vlaneseq
    %v315 = vshrl.u32 %v314, 7
    %v316 = vsub.s32 %v313, %v315
    %v317 = vrot.slane %v303, %v316
    %v318 = vcombine.high %v310, %v310
    %v319 = vcombine.high %v317, %v317
    %v321 = vunpack.c.l.s4 1966171168
    %v322 = vunpack.c.0.s8 %v321
    %v323 = vlaneseq
    %v324 = vshrl.u32 %v323, 7
    %v325 = vsub.s32 %v322, %v324
    %v326 = vrot.slane %v310, %v325
    %v328 = vunpack.c.l.s4 1966171168
    %v329 = vunpack.c.0.s8 %v328
    %v330 = vlaneseq
    %v331 = vshrl.u32 %v330, 7
    %v332 = vsub.s32 %v329, %v331
    %v333 = vrot.slane %v317, %v332
    %v335 = vunpack.c.l.s4 1966171168
    %v336 = vunpack.c.0.s8 %v335
    %v337 = vlaneseq
    %v338 = vshrl.u32 %v337, 7
    %v339 = vsub.s32 %v336, %v338
    %v340 = vrot.slane %v318, %v339
    %v342 = vunpack.c.l.s4 1966171168
    %v343 = vunpack.c.0.s8 %v342
    %v344 = vlaneseq
    %v345 = vshrl.u32 %v344, 7
    %v346 = vsub.s32 %v343, %v345
    %v347 = vrot.slane %v319, %v346
    %v348 = vcombine.high %v326, %v326
    %v349 = vcombine.high %v333, %v333
    %v350 = vcombine.high %v340, %v340
    %v351 = vcombine.high %v347, %v347
    %v616 = vunpack.c.l.b16 %v46
    %v617 = vunpack.c.h.b16 %v46
    %v618 = vunpack.c.l.b16 %v47
    %v619 = vunpack.c.l.b16 %v48
    %v620 = vunpack.c.h.b16 %v48
    %v621 = vunpack.c.l.b16 %v49
    %v622 = vunpack.c.l.b16 %v50
    %v623 = vunpack.c.h.b16 %v50
    %v624 = vunpack.c.l.b16 %v51
    %v625 = vunpack.c.l.b16 %v52
    %v626 = vunpack.c.h.b16 %v52
    %v627 = vunpack.c.l.b16 %v53
    %v628 = vunpack.c.l.b16 %v54
    %v629 = vunpack.c.h.b16 %v54
    %v630 = vunpack.c.l.b16 %v55
    %v631 = vunpack.c.l.b16 %v56
    %v632 = vunpack.c.h.b16 %v56
    %v633 = vunpack.c.l.b16 %v57
    %v634 = vunpack.c.l.b16 %v58
    %v635 = vunpack.c.h.b16 %v58
    %v636 = vunpack.c.l.b16 %v59
    %v637 = vunpack.c.l.b16 %v60
    %v638 = vunpack.c.h.b16 %v60
    %v639 = vunpack.c.l.b16 %v61
    %v640 = vunpack.c.l.b16 %v62
    %v641 = vunpack.c.h.b16 %v62
    %v642 = vunpack.c.l.b16 %v63
    %v643 = vunpack.c.l.b16 %v64
    %v644 = vunpack.c.h.b16 %v64
    %v645 = vunpack.c.l.b16 %v65
    %v646 = vunpack.c.l.b16 %v66
    %v647 = vunpack.c.h.b16 %v66
    %v648 = vunpack.c.l.b16 %v67
    %v649 = vunpack.c.l.b16 %v68
    %v650 = vunpack.c.h.b16 %v68
    %v651 = vunpack.c.l.b16 %v69
    %v652 = vunpack.c.l.b16 %v70
    %v653 = vunpack.c.h.b16 %v70
    %v654 = vunpack.c.l.b16 %v71
    %v655 = vunpack.c.l.b16 %v72
    %v656 = vunpack.c.h.b16 %v72
    %v657 = vunpack.c.l.b16 %v73
    %v658 = vunpack.c.l.b16 %v74
    %v659 = vunpack.c.h.b16 %v74
    %v660 = vunpack.c.l.b16 %v75
    %v661 = vunpack.c.l.b16 %v76
    %v662 = vunpack.c.h.b16 %v76
    %v663 = vunpack.c.l.b16 %v77
    %v664 = vunpack.c.l.b16 %v78
    %v665 = vunpack.c.h.b16 %v78
    %v666 = vunpack.c.l.b16 %v79
    %v667 = vunpack.c.l.b16 %v80
    %v668 = vunpack.c.h.b16 %v80
    %v669 = vunpack.c.l.b16 %v81
    %v670 = vunpack.c.l.b16 %v82
    %v671 = vunpack.c.h.b16 %v82
    %v672 = vunpack.c.l.b16 %v83
    %v673 = vunpack.c.l.b16 %v84
    %v674 = vunpack.c.h.b16 %v84
    %v675 = vunpack.c.l.b16 %v85
    %v676 = vunpack.c.l.b16 %v86
    %v677 = vunpack.c.h.b16 %v86
    %v678 = vunpack.c.l.b16 %v87
    %v679 = vunpack.c.l.b16 %v88
    %v680 = vunpack.c.h.b16 %v88
    %v681 = vunpack.c.l.b16 %v89
    %v682 = vunpack.c.l.b16 %v90
    %v683 = vunpack.c.h.b16 %v90
    %v684 = vunpack.c.l.b16 %v91
    %v685 = vunpack.c.l.b16 %v92
    %v686 = vunpack.c.h.b16 %v92
    %v687 = vunpack.c.l.b16 %v93
    %v688 = vunpack.c.l.b16 %v94
    %v689 = vunpack.c.h.b16 %v94
    %v690 = vunpack.c.l.b16 %v95
    %v691 = vunpack.c.l.b16 %v96
    %v692 = vunpack.c.h.b16 %v96
    %v693 = vunpack.c.l.b16 %v97
    %v694 = vunpack.c.l.b16 %v98
    %v695 = vunpack.c.h.b16 %v98
    %v696 = vunpack.c.l.b16 %v99
    %v697 = vunpack.c.l.b16 %v100
    %v698 = vunpack.c.h.b16 %v100
    %v699 = vunpack.c.l.b16 %v101
    %v700 = vunpack.c.l.b16 %v102
    %v701 = vunpack.c.h.b16 %v102
    %v702 = vunpack.c.l.b16 %v103
    %v703 = vunpack.c.l.b16 %v104
    %v704 = vunpack.c.h.b16 %v104
    %v705 = vunpack.c.l.b16 %v105
    %v706 = vunpack.c.l.b16 %v106
    %v707 = vunpack.c.h.b16 %v106
    %v708 = vunpack.c.l.b16 %v107
    %v709 = vunpack.c.l.b16 %v108
    %v710 = vunpack.c.h.b16 %v108
    %v711 = vunpack.c.l.b16 %v109
    %v712 = vunpack.c.l.b16 %v110
    %v713 = vunpack.c.h.b16 %v110
    %v714 = vunpack.c.l.b16 %v111
    %v715 = vunpack.c.l.b16 %v112
    %v716 = vunpack.c.h.b16 %v112
    %v717 = vunpack.c.l.b16 %v113
    %v718 = vunpack.c.l.b16 %v114
    %v719 = vunpack.c.h.b16 %v114
    %v720 = vunpack.c.l.b16 %v115
    %v721 = vunpack.c.l.b16 %v116
    %v722 = vunpack.c.h.b16 %v116
    %v723 = vunpack.c.l.b16 %v117
    %v724 = vunpack.c.l.b16 %v118
    %v725 = vunpack.c.h.b16 %v118
    %v726 = vunpack.c.l.b16 %v119
    %v727 = vunpack.c.l.b16 %v120
    %v728 = vunpack.c.h.b16 %v120
    %v729 = vunpack.c.l.b16 %v121
    %v730 = vunpack.c.l.b16 %v122
    %v731 = vunpack.c.h.b16 %v122
    %v732 = vunpack.c.l.b16 %v123
    %v733 = vunpack.c.l.b16 %v124
    %v734 = vunpack.c.h.b16 %v124
    %v735 = vunpack.c.l.b16 %v125
    %v736 = vunpack.c.l.b16 %v126
    %v737 = vunpack.c.h.b16 %v126
    %v738 = vunpack.c.l.b16 %v127
    %v739 = vunpack.c.l.b16 %v128
    %v740 = vunpack.c.h.b16 %v128
    %v741 = vunpack.c.l.b16 %v129
    %v742 = vunpack.c.l.b16 %v130
    %v743 = vunpack.c.h.b16 %v130
    %v744 = vunpack.c.l.b16 %v131
    %v745 = vunpack.c.l.b16 %v132
    %v746 = vunpack.c.h.b16 %v132
    %v747 = vunpack.c.l.b16 %v133
    %v748 = vunpack.c.l.b16 %v134
    %v749 = vunpack.c.h.b16 %v134
    %v750 = vunpack.c.l.b16 %v135
    %v751 = vunpack.c.l.b16 %v136
    %v752 = vunpack.c.h.b16 %v136
    %v753 = vunpack.c.l.b16 %v137
    %v754 = vunpack.c.l.b16 %v138
    %v755 = vunpack.c.h.b16 %v138
    %v756 = vunpack.c.l.b16 %v139
    %v757 = vunpack.c.l.b16 %v140
    %v758 = vunpack.c.h.b16 %v140
    %v759 = vunpack.c.l.b16 %v141
    %v760 = vunpack.c.l.b16 %v142
    %v761 = vunpack.c.h.b16 %v142
    %v762 = vunpack.c.l.b16 %v143
    %v763 = vunpack.c.l.b16 %v144
    %v764 = vunpack.c.h.b16 %v144
    %v765 = vunpack.c.l.b16 %v145
    %v766 = vunpack.c.l.b16 %v146
    %v767 = vunpack.c.h.b16 %v146
    %v768 = vunpack.c.l.b16 %v147
    %v769 = vunpack.c.l.b16 %v148
    %v770 = vunpack.c.h.b16 %v148
    %v771 = vunpack.c.l.b16 %v149
    %v772 = vunpack.c.l.b16 %v150
    %v773 = vunpack.c.h.b16 %v150
    %v774 = vunpack.c.l.b16 %v151
    %v775 = vunpack.c.l.b16 %v152
    %v776 = vunpack.c.h.b16 %v152
    %v777 = vunpack.c.l.b16 %v153
    %v778 = vunpack.c.l.b16 %v154
    %v779 = vunpack.c.h.b16 %v154
    %v780 = vunpack.c.l.b16 %v155
    %v781 = vunpack.c.l.b16 %v156
    %v782 = vunpack.c.h.b16 %v156
    %v783 = vunpack.c.l.b16 %v157
    %v784 = vunpack.c.l.b16 %v158
    %v785 = vunpack.c.h.b16 %v158
    %v786 = vunpack.c.l.b16 %v159
    %v787 = vunpack.c.l.b16 %v160
    %v788 = vunpack.c.h.b16 %v160
    %v789 = vunpack.c.l.b16 %v161
    %v790 = vunpack.c.l.b16 %v162
    %v791 = vunpack.c.h.b16 %v162
    %v792 = vunpack.c.l.b16 %v163
    %v793 = vunpack.c.l.b16 %v164
    %v794 = vunpack.c.h.b16 %v164
    %v795 = vunpack.c.l.b16 %v165
    %v796 = vunpack.c.l.b16 %v166
    %v797 = vunpack.c.h.b16 %v166
    %v798 = vunpack.c.l.b16 %v167
    %v799 = vunpack.c.l.b16 %v168
    %v800 = vunpack.c.h.b16 %v168
    %v801 = vunpack.c.l.b16 %v169
    %v802 = vunpack.c.l.b16 %v170
    %v803 = vunpack.c.h.b16 %v170
    %v804 = vunpack.c.l.b16 %v171
    %v805 = vunpack.c.l.b16 %v172
    %v806 = vunpack.c.h.b16 %v172
    %v807 = vunpack.c.l.b16 %v173
    %v808 = vunpack.c.l.b16 %v174
    %v809 = vunpack.c.h.b16 %v174
    %v810 = vunpack.c.l.b16 %v175
    %v811 = vunpack.c.l.b16 %v176
    %v812 = vunpack.c.h.b16 %v176
    %v813 = vunpack.c.l.b16 %v177
    %v814 = vunpack.c.l.b16 %v178
    %v815 = vunpack.c.h.b16 %v178
    %v816 = vunpack.c.l.b16 %v179
    %v817 = vunpack.c.l.b16 %v180
    %v818 = vunpack.c.h.b16 %v180
    %v819 = vunpack.c.l.b16 %v181
    %v820 = vunpack.c.l.b16 %v182
    %v821 = vunpack.c.h.b16 %v182
    %v822 = vunpack.c.l.b16 %v183
    %v823 = vunpack.c.l.b16 %v184
    %v824 = vunpack.c.h.b16 %v184
    %v825 = vunpack.c.l.b16 %v185
    %v826 = vunpack.c.l.b16 %v186
    %v827 = vunpack.c.h.b16 %v186
    %v828 = vunpack.c.l.b16 %v187
    %v829 = vunpack.c.l.b16 %v188
    %v830 = vunpack.c.h.b16 %v188
    %v831 = vunpack.c.l.b16 %v189
    %v832 = vunpack.c.l.b16 %v190
    %v833 = vunpack.c.h.b16 %v190
    %v834 = vunpack.c.l.b16 %v191
    %v835 = vunpack.c.l.b16 %v192
    %v836 = vunpack.c.h.b16 %v192
    %v837 = vunpack.c.l.b16 %v193
    %v838 = vunpack.c.l.b16 %v194
    %v839 = vunpack.c.h.b16 %v194
    %v840 = vunpack.c.l.b16 %v195
    %v841 = vunpack.c.l.b16 %v196
    %v842 = vunpack.c.h.b16 %v196
    %v843 = vunpack.c.l.b16 %v197
    %v844 = vunpack.c.l.b16 %v198
    %v845 = vunpack.c.h.b16 %v198
    %v846 = vunpack.c.l.b16 %v199
    %v847 = vunpack.c.l.b16 %v200
    %v848 = vunpack.c.h.b16 %v200
    %v849 = vunpack.c.l.b16 %v201
    %v850 = vunpack.c.l.b16 %v202
    %v851 = vunpack.c.h.b16 %v202
    %v852 = vunpack.c.l.b16 %v203
    %v853 = vunpack.c.l.b16 %v204
    %v854 = vunpack.c.h.b16 %v204
    %v855 = vunpack.c.l.b16 %v205
    %v856 = vunpack.c.l.b16 %v206
    %v857 = vunpack.c.h.b16 %v206
    %v858 = vunpack.c.l.b16 %v207
    %v859 = vunpack.c.l.b16 %v208
    %v860 = vunpack.c.h.b16 %v208
    %v861 = vunpack.c.l.b16 %v209
    %v862 = vunpack.c.l.b16 %v210
    %v863 = vunpack.c.h.b16 %v210
    %v864 = vunpack.c.l.b16 %v211
    %v865 = vunpack.c.l.b16 %v212
    %v866 = vunpack.c.h.b16 %v212
    %v867 = vunpack.c.l.b16 %v213
    %v868 = vunpack.c.l.b16 %v214
    %v869 = vunpack.c.h.b16 %v214
    %v870 = vunpack.c.l.b16 %v215
    %v871 = vunpack.c.l.b16 %v216
    %v872 = vunpack.c.h.b16 %v216
    %v873 = vunpack.c.l.b16 %v217
    %v874 = vunpack.c.l.b16 %v218
    %v875 = vunpack.c.h.b16 %v218
    %v876 = vunpack.c.l.b16 %v219
    %v877 = vunpack.c.l.b16 %v220
    %v878 = vunpack.c.h.b16 %v220
    %v879 = vunpack.c.l.b16 %v221
    %v880 = vunpack.c.l.b16 %v222
    %v881 = vunpack.c.h.b16 %v222
    %v882 = vunpack.c.l.b16 %v223
    %v883 = vunpack.c.l.b16 %v224
    %v884 = vunpack.c.h.b16 %v224
    %v885 = vunpack.c.l.b16 %v225
    %v886 = vunpack.c.l.b16 %v226
    %v887 = vunpack.c.h.b16 %v226
    %v888 = vunpack.c.l.b16 %v227
    %v889 = vunpack.c.l.b16 %v228
    %v890 = vunpack.c.h.b16 %v228
    %v891 = vunpack.c.l.b16 %v229
    %v892 = vunpack.c.l.b16 %v230
    %v893 = vunpack.c.h.b16 %v230
    %v894 = vunpack.c.l.b16 %v231
    %v895 = vunpack.c.l.b16 %v232
    %v896 = vunpack.c.h.b16 %v232
    %v897 = vunpack.c.l.b16 %v233
    %v898 = vunpack.c.l.b16 %v234
    %v899 = vunpack.c.h.b16 %v234
    %v900 = vunpack.c.l.b16 %v235
    %v901 = vunpack.c.l.b16 %v236
    %v902 = vunpack.c.h.b16 %v236
    %v903 = vunpack.c.l.b16 %v237
    %v904 = vunpack.c.l.b16 %v238
    %v905 = vunpack.c.h.b16 %v238
    %v906 = vunpack.c.l.b16 %v239
    %v907 = vunpack.c.l.b16 %v240
    %v908 = vunpack.c.h.b16 %v240
    %v909 = vunpack.c.l.b16 %v241
    %v910 = vunpack.c.l.b16 %v242
    %v911 = vunpack.c.h.b16 %v242
    %v912 = vunpack.c.l.b16 %v243
    %v913 = vunpack.c.l.b16 %v244
    %v914 = vunpack.c.h.b16 %v244
    %v915 = vunpack.c.l.b16 %v245
    %v916 = vunpack.c.l.b16 %v246
    %v917 = vunpack.c.h.b16 %v246
    %v918 = vunpack.c.l.b16 %v247
    %v919 = vunpack.c.l.b16 %v248
    %v920 = vunpack.c.h.b16 %v248
    %v921 = vunpack.c.l.b16 %v249
    %v922 = vunpack.c.l.b16 %v250
    %v923 = vunpack.c.h.b16 %v250
    %v924 = vunpack.c.l.b16 %v251
    %v925 = vunpack.c.l.b16 %v252
    %v926 = vunpack.c.h.b16 %v252
    %v927 = vunpack.c.l.b16 %v253
    %v928 = vunpack.c.l.b16 %v254
    %v929 = vunpack.c.h.b16 %v254
    %v930 = vunpack.c.l.b16 %v255
    %v931 = vunpack.c.l.b16 %v256
    %v932 = vunpack.c.h.b16 %v256
    %v933 = vunpack.c.l.b16 %v257
    %v934 = vunpack.c.l.b16 %v258
    %v935 = vunpack.c.h.b16 %v258
    %v936 = vunpack.c.l.b16 %v259
    %v937 = vunpack.c.l.b16 %v260
    %v938 = vunpack.c.h.b16 %v260
    %v939 = vunpack.c.l.b16 %v261
    %v940 = vunpack.c.l.b16 %v262
    %v941 = vunpack.c.h.b16 %v262
    %v942 = vunpack.c.l.b16 %v263
    %v943 = vunpack.c.l.b16 %v264
    %v944 = vunpack.c.h.b16 %v264
    %v945 = vunpack.c.l.b16 %v265
    %v946 = vunpack.c.l.b16 %v266
    %v947 = vunpack.c.h.b16 %v266
    %v948 = vunpack.c.l.b16 %v267
    %v949 = vunpack.c.l.b16 %v268
    %v950 = vunpack.c.h.b16 %v268
    %v951 = vunpack.c.l.b16 %v269
    %v952 = vunpack.c.l.b16 %v270
    %v953 = vunpack.c.h.b16 %v270
    %v954 = vunpack.c.l.b16 %v271
    %v955 = vunpack.c.l.b16 %v272
    %v956 = vunpack.c.h.b16 %v272
    %v957 = vunpack.c.l.b16 %v273
    %v958 = vunpack.c.l.b16 %v274
    %v959 = vunpack.c.h.b16 %v274
    %v960 = vunpack.c.l.b16 %v275
    %v961 = vunpack.c.l.b16 %v276
    %v962 = vunpack.c.h.b16 %v276
    %v963 = vunpack.c.l.b16 %v277
    %v964 = vunpack.c.l.b16 %v278
    %v965 = vunpack.c.h.b16 %v278
    %v966 = vunpack.c.l.b16 %v279
    %v967 = vunpack.c.l.b16 %v280
    %v968 = vunpack.c.h.b16 %v280
    %v969 = vunpack.c.l.b16 %v281
    %v970 = vunpack.c.l.b16 %v282
    %v971 = vunpack.c.h.b16 %v282
    %v972 = vunpack.c.l.b16 %v283
    %v973 = vunpack.c.l.b16 %v284
    %v974 = vunpack.c.h.b16 %v284
    %v975 = vunpack.c.l.b16 %v285
    %v976 = vunpack.c.l.b16 %v286
    %v977 = vunpack.c.h.b16 %v286
    %v978 = vunpack.c.l.b16 %v287
    %v979 = vunpack.c.l.b16 %v288
    %v980 = vunpack.c.h.b16 %v288
    %v981 = vunpack.c.l.b16 %v289
    %v982 = vunpack.c.l.b16 %v290
    %v983 = vunpack.c.h.b16 %v290
    %v984 = vunpack.c.l.b16 %v291
    %v985 = vunpack.c.l.b16 %v292
    %v986 = vunpack.c.h.b16 %v292
    %v987 = vunpack.c.l.b16 %v293
    %v988 = vunpack.c.l.b16 %v294
    %v989 = vunpack.c.h.b16 %v294
    %v990 = vunpack.c.l.b16 %v295
    %v991 = vunpack.c.l.b16 %v296
    %v992 = vunpack.c.h.b16 %v296
    %v993 = vunpack.c.l.b16 %v297
    %v994 = vunpack.c.l.b16 %v298
    %v995 = vunpack.c.h.b16 %v298
    %v996 = vunpack.c.l.b16 %v299
    %v997 = vunpack.c.l.b16 %v300
    %v998 = vunpack.c.h.b16 %v300
    %v999 = vunpack.c.l.b16 %v301
    %v1000 = vpack.c.b16 %v619, %v616
    %v1001 = vpack.c.b16 %v620, %v617
    %v1002 = vpack.c.b16 %v621, %v618
    %v1003 = vpack.c.b16 %v625, %v622
    %v1004 = vpack.c.b16 %v626, %v623
    %v1005 = vpack.c.b16 %v627, %v624
    %v1006 = vpack.c.b16 %v631, %v628
    %v1007 = vpack.c.b16 %v632, %v629
    %v1008 = vpack.c.b16 %v633, %v630
    %v1009 = vpack.c.b16 %v637, %v634
    %v1010 = vpack.c.b16 %v638, %v635
    %v1011 = vpack.c.b16 %v639, %v636
    %v1012 = vpack.c.b16 %v643, %v640
    %v1013 = vpack.c.b16 %v644, %v641
    %v1014 = vpack.c.b16 %v645, %v642
    %v1015 = vpack.c.b16 %v649, %v646
    %v1016 = vpack.c.b16 %v650, %v647
    %v1017 = vpack.c.b16 %v651, %v648
    %v1018 = vpack.c.b16 %v655, %v652
    %v1019 = vpack.c.b16 %v656, %v653
    %v1020 = vpack.c.b16 %v657, %v654
    %v1021 = vpack.c.b16 %v661, %v658
    %v1022 = vpack.c.b16 %v662, %v659
    %v1023 = vpack.c.b16 %v663, %v660
    %v1024 = vpack.c.b16 %v667, %v664
    %v1025 = vpack.c.b16 %v668, %v665
    %v1026 = vpack.c.b16 %v669, %v666
    %v1027 = vpack.c.b16 %v673, %v670
    %v1028 = vpack.c.b16 %v674, %v671
    %v1029 = vpack.c.b16 %v675, %v672
    %v1030 = vpack.c.b16 %v679, %v676
    %v1031 = vpack.c.b16 %v680, %v677
    %v1032 = vpack.c.b16 %v681, %v678
    %v1033 = vpack.c.b16 %v685, %v682
    %v1034 = vpack.c.b16 %v686, %v683
    %v1035 = vpack.c.b16 %v687, %v684
    %v1036 = vpack.c.b16 %v691, %v688
    %v1037 = vpack.c.b16 %v692, %v689
    %v1038 = vpack.c.b16 %v693, %v690
    %v1039 = vpack.c.b16 %v697, %v694
    %v1040 = vpack.c.b16 %v698, %v695
    %v1041 = vpack.c.b16 %v699, %v696
    %v1042 = vpack.c.b16 %v703, %v700
    %v1043 = vpack.c.b16 %v704, %v701
    %v1044 = vpack.c.b16 %v705, %v702
    %v1045 = vpack.c.b16 %v709, %v706
    %v1046 = vpack.c.b16 %v710, %v707
    %v1047 = vpack.c.b16 %v711, %v708
    %v1048 = vpack.c.b16 %v715, %v712
    %v1049 = vpack.c.b16 %v716, %v713
    %v1050 = vpack.c.b16 %v717, %v714
    %v1051 = vpack.c.b16 %v721, %v718
    %v1052 = vpack.c.b16 %v722, %v719
    %v1053 = vpack.c.b16 %v723, %v720
    %v1054 = vpack.c.b16 %v727, %v724
    %v1055 = vpack.c.b16 %v728, %v725
    %v1056 = vpack.c.b16 %v729, %v726
    %v1057 = vpack.c.b16 %v733, %v730
    %v1058 = vpack.c.b16 %v734, %v731
    %v1059 = vpack.c.b16 %v735, %v732
    %v1060 = vpack.c.b16 %v739, %v736
    %v1061 = vpack.c.b16 %v740, %v737
    %v1062 = vpack.c.b16 %v741, %v738
    %v1063 = vpack.c.b16 %v745, %v742
    %v1064 = vpack.c.b16 %v746, %v743
    %v1065 = vpack.c.b16 %v747, %v744
    %v1066 = vpack.c.b16 %v751, %v748
    %v1067 = vpack.c.b16 %v752, %v749
    %v1068 = vpack.c.b16 %v753, %v750
    %v1069 = vpack.c.b16 %v757, %v754
    %v1070 = vpack.c.b16 %v758, %v755
    %v1071 = vpack.c.b16 %v759, %v756
    %v1072 = vpack.c.b16 %v763, %v760
    %v1073 = vpack.c.b16 %v764, %v761
    %v1074 = vpack.c.b16 %v765, %v762
    %v1075 = vpack.c.b16 %v769, %v766
    %v1076 = vpack.c.b16 %v770, %v767
    %v1077 = vpack.c.b16 %v771, %v768
    %v1078 = vpack.c.b16 %v775, %v772
    %v1079 = vpack.c.b16 %v776, %v773
    %v1080 = vpack.c.b16 %v777, %v774
    %v1081 = vpack.c.b16 %v781, %v778
    %v1082 = vpack.c.b16 %v782, %v779
    %v1083 = vpack.c.b16 %v783, %v780
    %v1084 = vpack.c.b16 %v787, %v784
    %v1085 = vpack.c.b16 %v788, %v785
    %v1086 = vpack.c.b16 %v789, %v786
    %v1087 = vpack.c.b16 %v793, %v790
    %v1088 = vpack.c.b16 %v794, %v791
    %v1089 = vpack.c.b16 %v795, %v792
    %v1090 = vpack.c.b16 %v799, %v796
    %v1091 = vpack.c.b16 %v800, %v797
    %v1092 = vpack.c.b16 %v801, %v798
    %v1093 = vpack.c.b16 %v805, %v802
    %v1094 = vpack.c.b16 %v806, %v803
    %v1095 = vpack.c.b16 %v807, %v804
    %v1096 = vpack.c.b16 %v811, %v808
    %v1097 = vpack.c.b16 %v812, %v809
    %v1098 = vpack.c.b16 %v813, %v810
    %v1099 = vpack.c.b16 %v817, %v814
    %v1100 = vpack.c.b16 %v818, %v815
    %v1101 = vpack.c.b16 %v819, %v816
    %v1102 = vpack.c.b16 %v823, %v820
    %v1103 = vpack.c.b16 %v824, %v821
    %v1104 = vpack.c.b16 %v825, %v822
    %v1105 = vpack.c.b16 %v829, %v826
    %v1106 = vpack.c.b16 %v830, %v827
    %v1107 = vpack.c.b16 %v831, %v828
    %v1108 = vpack.c.b16 %v835, %v832
    %v1109 = vpack.c.b16 %v836, %v833
    %v1110 = vpack.c.b16 %v837, %v834
    %v1111 = vpack.c.b16 %v841, %v838
    %v1112 = vpack.c.b16 %v842, %v839
    %v1113 = vpack.c.b16 %v843, %v840
    %v1114 = vpack.c.b16 %v847, %v844
    %v1115 = vpack.c.b16 %v848, %v845
    %v1116 = vpack.c.b16 %v849, %v846
    %v1117 = vpack.c.b16 %v853, %v850
    %v1118 = vpack.c.b16 %v854, %v851
    %v1119 = vpack.c.b16 %v855, %v852
    %v1120 = vpack.c.b16 %v859, %v856
    %v1121 = vpack.c.b16 %v860, %v857
    %v1122 = vpack.c.b16 %v861, %v858
    %v1123 = vpack.c.b16 %v865, %v862
    %v1124 = vpack.c.b16 %v866, %v863
    %v1125 = vpack.c.b16 %v867, %v864
    %v1126 = vpack.c.b16 %v871, %v868
    %v1127 = vpack.c.b16 %v872, %v869
    %v1128 = vpack.c.b16 %v873, %v870
    %v1129 = vpack.c.b16 %v877, %v874
    %v1130 = vpack.c.b16 %v878, %v875
    %v1131 = vpack.c.b16 %v879, %v876
    %v1132 = vpack.c.b16 %v883, %v880
    %v1133 = vpack.c.b16 %v884, %v881
    %v1134 = vpack.c.b16 %v885, %v882
    %v1135 = vpack.c.b16 %v889, %v886
    %v1136 = vpack.c.b16 %v890, %v887
    %v1137 = vpack.c.b16 %v891, %v888
    %v1138 = vpack.c.b16 %v895, %v892
    %v1139 = vpack.c.b16 %v896, %v893
    %v1140 = vpack.c.b16 %v897, %v894
    %v1141 = vpack.c.b16 %v901, %v898
    %v1142 = vpack.c.b16 %v902, %v899
    %v1143 = vpack.c.b16 %v903, %v900
    %v1144 = vpack.c.b16 %v907, %v904
    %v1145 = vpack.c.b16 %v908, %v905
    %v1146 = vpack.c.b16 %v909, %v906
    %v1147 = vpack.c.b16 %v913, %v910
    %v1148 = vpack.c.b16 %v914, %v911
    %v1149 = vpack.c.b16 %v915, %v912
    %v1150 = vpack.c.b16 %v919, %v916
    %v1151 = vpack.c.b16 %v920, %v917
    %v1152 = vpack.c.b16 %v921, %v918
    %v1153 = vpack.c.b16 %v925, %v922
    %v1154 = vpack.c.b16 %v926, %v923
    %v1155 = vpack.c.b16 %v927, %v924
    %v1156 = vpack.c.b16 %v931, %v928
    %v1157 = vpack.c.b16 %v932, %v929
    %v1158 = vpack.c.b16 %v933, %v930
    %v1159 = vpack.c.b16 %v937, %v934
    %v1160 = vpack.c.b16 %v938, %v935
    %v1161 = vpack.c.b16 %v939, %v936
    %v1162 = vpack.c.b16 %v943, %v940
    %v1163 = vpack.c.b16 %v944, %v941
    %v1164 = vpack.c.b16 %v945, %v942
    %v1165 = vpack.c.b16 %v949, %v946
    %v1166 = vpack.c.b16 %v950, %v947
    %v1167 = vpack.c.b16 %v951, %v948
    %v1168 = vpack.c.b16 %v955, %v952
    %v1169 = vpack.c.b16 %v956, %v953
    %v1170 = vpack.c.b16 %v957, %v954
    %v1171 = vpack.c.b16 %v961, %v958
    %v1172 = vpack.c.b16 %v962, %v959
    %v1173 = vpack.c.b16 %v963, %v960
    %v1174 = vpack.c.b16 %v967, %v964
    %v1175 = vpack.c.b16 %v968, %v965
    %v1176 = vpack.c.b16 %v969, %v966
    %v1177 = vpack.c.b16 %v973, %v970
    %v1178 = vpack.c.b16 %v974, %v971
    %v1179 = vpack.c.b16 %v975, %v972
    %v1180 = vpack.c.b16 %v979, %v976
    %v1181 = vpack.c.b16 %v980, %v977
    %v1182 = vpack.c.b16 %v981, %v978
    %v1183 = vpack.c.b16 %v985, %v982
    %v1184 = vpack.c.b16 %v986, %v983
    %v1185 = vpack.c.b16 %v987, %v984
    %v1186 = vpack.c.b16 %v991, %v988
    %v1187 = vpack.c.b16 %v992, %v989
    %v1188 = vpack.c.b16 %v993, %v990
    %v1189 = vpack.c.b16 %v997, %v994
    %v1190 = vpack.c.b16 %v998, %v995
    %v1191 = vpack.c.b16 %v999, %v996
    %1384 = vmatprep.subr.bf16.mxu0 %v1001
    %1385 = vmatpush1.bf16.msra.mxu0 %v1000
    %1386 = vmatprep.subr.bf16.mxu0 %v1004
    %1387 = vmatpush1.bf16.msra.mxu0 %v1003
    %1388 = vmatprep.subr.bf16.mxu0 %v1007
    %1389 = vmatpush1.bf16.msra.mxu0 %v1006
    %1390 = vmatprep.subr.bf16.mxu0 %v1010
    %1391 = vmatpush1.bf16.msra.mxu0 %v1009
    %1392 = vmatprep.subr.bf16.mxu0 %v1013
    %1393 = vmatpush1.bf16.msra.mxu0 %v1012
    %1394 = vmatprep.subr.bf16.mxu0 %v1016
    %1395 = vmatpush1.bf16.msra.mxu0 %v1015
    %1396 = vmatprep.subr.bf16.mxu0 %v1019
    %1397 = vmatpush1.bf16.msra.mxu0 %v1018
    %1398 = vmatprep.subr.bf16.mxu0 %v1022
    %1399 = vmatpush1.bf16.msra.mxu0 %v1021
    %1400 = vmatprep.subr.bf16.mxu0 %v1025
    %1401 = vmatpush1.bf16.msra.mxu0 %v1024
    %1402 = vmatprep.subr.bf16.mxu0 %v1028
    %1403 = vmatpush1.bf16.msra.mxu0 %v1027
    %1404 = vmatprep.subr.bf16.mxu0 %v1031
    %1405 = vmatpush1.bf16.msra.mxu0 %v1030
    %1406 = vmatprep.subr.bf16.mxu0 %v1034
    %1407 = vmatpush1.bf16.msra.mxu0 %v1033
    %1408 = vmatprep.subr.bf16.mxu0 %v1037
    %1409 = vmatpush1.bf16.msra.mxu0 %v1036
    %1410 = vmatprep.subr.bf16.mxu0 %v1040
    %1411 = vmatpush1.bf16.msra.mxu0 %v1039
    %1412 = vmatprep.subr.bf16.mxu0 %v1043
    %1413 = vmatpush1.bf16.msra.mxu0 %v1042
    %1414 = vmatprep.subr.bf16.mxu0 %v1046
    %1415 = vmatpush1.bf16.msra.mxu0 %v1045
    %1416 = vmatprep.mubr.bf16.mxu0 %v340
    %1417 = vmatmul.mubr.bf16.gmra.mrb[0].mxu0 %v326
    %v1418 = vpop.f32.mrb[0].mxu0
    %v1419 = vadd.f32 0.0, %v1418
    %v1420 = vpop.f32.mrb[0].mxu0
    %v1421 = vadd.f32 0.0, %v1420
    %v1422 = vpop.f32.mrb[0].mxu0
    %v1423 = vpop.f32.mrb[0].mxu0
    %1424 = vdwg.mxu0
    %1425 = vmatprep.subr.bf16.mxu0 %v1049
    %1426 = vmatpush1.bf16.msra.mxu0 %v1048
    %1427 = vmatprep.subr.bf16.mxu0 %v1052
    %1428 = vmatpush1.bf16.msra.mxu0 %v1051
    %1429 = vmatprep.subr.bf16.mxu0 %v1055
    %1430 = vmatpush1.bf16.msra.mxu0 %v1054
    %1431 = vmatprep.subr.bf16.mxu0 %v1058
    %1432 = vmatpush1.bf16.msra.mxu0 %v1057
    %1433 = vmatprep.subr.bf16.mxu0 %v1061
    %1434 = vmatpush1.bf16.msra.mxu0 %v1060
    %1435 = vmatprep.subr.bf16.mxu0 %v1064
    %1436 = vmatpush1.bf16.msra.mxu0 %v1063
    %1437 = vmatprep.subr.bf16.mxu0 %v1067
    %1438 = vmatpush1.bf16.msra.mxu0 %v1066
    %1439 = vmatprep.subr.bf16.mxu0 %v1070
    %1440 = vmatpush1.bf16.msra.mxu0 %v1069
    %1441 = vmatprep.subr.bf16.mxu0 %v1073
    %1442 = vmatpush1.bf16.msra.mxu0 %v1072
    %1443 = vmatprep.subr.bf16.mxu0 %v1076
    %1444 = vmatpush1.bf16.msra.mxu0 %v1075
    %1445 = vmatprep.subr.bf16.mxu0 %v1079
    %1446 = vmatpush1.bf16.msra.mxu0 %v1078
    %1447 = vmatprep.subr.bf16.mxu0 %v1082
    %1448 = vmatpush1.bf16.msra.mxu0 %v1081
    %1449 = vmatprep.subr.bf16.mxu0 %v1085
    %1450 = vmatpush1.bf16.msra.mxu0 %v1084
    %1451 = vmatprep.subr.bf16.mxu0 %v1088
    %1452 = vmatpush1.bf16.msra.mxu0 %v1087
    %1453 = vmatprep.subr.bf16.mxu0 %v1091
    %1454 = vmatpush1.bf16.msra.mxu0 %v1090
    %1455 = vmatprep.subr.bf16.mxu0 %v1094
    %1456 = vmatpush1.bf16.msra.mxu0 %v1093
    %1457 = vmatprep.mubr.bf16.mxu0 %v350
    %1458 = vmatmul.mubr.bf16.gmra.mrb[0].mxu0 %v348
    %v1459 = vpop.f32.mrb[0].mxu0
    %v1460 = vadd.f32 %v1419, %v1459
    %v1461 = vpop.f32.mrb[0].mxu0
    %v1462 = vadd.f32 %v1421, %v1461
    %v1463 = vpop.f32.mrb[0].mxu0
    %v1464 = vpop.f32.mrb[0].mxu0
    %1465 = vdwg.mxu0
    %1466 = vmatprep.subr.bf16.mxu0 %v1097
    %1467 = vmatpush1.bf16.msra.mxu0 %v1096
    %1468 = vmatprep.subr.bf16.mxu0 %v1100
    %1469 = vmatpush1.bf16.msra.mxu0 %v1099
    %1470 = vmatprep.subr.bf16.mxu0 %v1103
    %1471 = vmatpush1.bf16.msra.mxu0 %v1102
    %1472 = vmatprep.subr.bf16.mxu0 %v1106
    %1473 = vmatpush1.bf16.msra.mxu0 %v1105
    %1474 = vmatprep.subr.bf16.mxu0 %v1109
    %1475 = vmatpush1.bf16.msra.mxu0 %v1108
    %1476 = vmatprep.subr.bf16.mxu0 %v1112
    %1477 = vmatpush1.bf16.msra.mxu0 %v1111
    %1478 = vmatprep.subr.bf16.mxu0 %v1115
    %1479 = vmatpush1.bf16.msra.mxu0 %v1114
    %1480 = vmatprep.subr.bf16.mxu0 %v1118
    %1481 = vmatpush1.bf16.msra.mxu0 %v1117
    %1482 = vmatprep.subr.bf16.mxu0 %v1121
    %1483 = vmatpush1.bf16.msra.mxu0 %v1120
    %1484 = vmatprep.subr.bf16.mxu0 %v1124
    %1485 = vmatpush1.bf16.msra.mxu0 %v1123
    %1486 = vmatprep.subr.bf16.mxu0 %v1127
    %1487 = vmatpush1.bf16.msra.mxu0 %v1126
    %1488 = vmatprep.subr.bf16.mxu0 %v1130
    %1489 = vmatpush1.bf16.msra.mxu0 %v1129
    %1490 = vmatprep.subr.bf16.mxu0 %v1133
    %1491 = vmatpush1.bf16.msra.mxu0 %v1132
    %1492 = vmatprep.subr.bf16.mxu0 %v1136
    %1493 = vmatpush1.bf16.msra.mxu0 %v1135
    %1494 = vmatprep.subr.bf16.mxu0 %v1139
    %1495 = vmatpush1.bf16.msra.mxu0 %v1138
    %1496 = vmatprep.subr.bf16.mxu0 %v1142
    %1497 = vmatpush1.bf16.msra.mxu0 %v1141
    %1498 = vmatprep.mubr.bf16.mxu0 %v347
    %1499 = vmatmul.mubr.bf16.gmra.mrb[0].mxu0 %v333
    %v1500 = vpop.f32.mrb[0].mxu0
    %v1501 = vadd.f32 %v1460, %v1500
    %v1502 = vpop.f32.mrb[0].mxu0
    %v1503 = vadd.f32 %v1462, %v1502
    %v1504 = vpop.f32.mrb[0].mxu0
    %v1505 = vpop.f32.mrb[0].mxu0
    %1506 = vdwg.mxu0
    %1507 = vmatprep.subr.bf16.mxu0 %v1145
    %1508 = vmatpush1.bf16.msra.mxu0 %v1144
    %1509 = vmatprep.subr.bf16.mxu0 %v1148
    %1510 = vmatpush1.bf16.msra.mxu0 %v1147
    %1511 = vmatprep.subr.bf16.mxu0 %v1151
    %1512 = vmatpush1.bf16.msra.mxu0 %v1150
    %1513 = vmatprep.subr.bf16.mxu0 %v1154
    %1514 = vmatpush1.bf16.msra.mxu0 %v1153
    %1515 = vmatprep.subr.bf16.mxu0 %v1157
    %1516 = vmatpush1.bf16.msra.mxu0 %v1156
    %1517 = vmatprep.subr.bf16.mxu0 %v1160
    %1518 = vmatpush1.bf16.msra.mxu0 %v1159
    %1519 = vmatprep.subr.bf16.mxu0 %v1163
    %1520 = vmatpush1.bf16.msra.mxu0 %v1162
    %1521 = vmatprep.subr.bf16.mxu0 %v1166
    %1522 = vmatpush1.bf16.msra.mxu0 %v1165
    %1523 = vmatprep.subr.bf16.mxu0 %v1169
    %1524 = vmatpush1.bf16.msra.mxu0 %v1168
    %1525 = vmatprep.subr.bf16.mxu0 %v1172
    %1526 = vmatpush1.bf16.msra.mxu0 %v1171
    %1527 = vmatprep.subr.bf16.mxu0 %v1175
    %1528 = vmatpush1.bf16.msra.mxu0 %v1174
    %1529 = vmatprep.subr.bf16.mxu0 %v1178
    %1530 = vmatpush1.bf16.msra.mxu0 %v1177
    %1531 = vmatprep.subr.bf16.mxu0 %v1181
    %1532 = vmatpush1.bf16.msra.mxu0 %v1180
    %1533 = vmatprep.subr.bf16.mxu0 %v1184
    %1534 = vmatpush1.bf16.msra.mxu0 %v1183
    %1535 = vmatprep.subr.bf16.mxu0 %v1187
    %1536 = vmatpush1.bf16.msra.mxu0 %v1186
    %1537 = vmatprep.subr.bf16.mxu0 %v1190
    %1538 = vmatpush1.bf16.msra.mxu0 %v1189
    %1539 = vmatprep.mubr.bf16.mxu0 %v351
    %1540 = vmatmul.mubr.bf16.gmra.mrb[0].mxu0 %v349
    %v1541 = vpop.f32.mrb[0].mxu0
    %v1542 = vadd.f32 %v1501, %v1541
    %v1543 = vpop.f32.mrb[0].mxu0
    %v1544 = vadd.f32 %v1503, %v1543
    %v1545 = vpop.f32.mrb[0].mxu0
    %v1546 = vpop.f32.mrb[0].mxu0
    %1547 = vdwg.mxu0
    %1548 = vmatprep.subr.bf16.mxu0 0
    %1549 = vmatpush1.bf16.msra.mxu0 %v1002
    %1550 = vmatprep.subr.bf16.mxu0 0
    %1551 = vmatpush1.bf16.msra.mxu0 %v1005
    %1552 = vmatprep.subr.bf16.mxu0 0
    %1553 = vmatpush1.bf16.msra.mxu0 %v1008
    %1554 = vmatprep.subr.bf16.mxu0 0
    %1555 = vmatpush1.bf16.msra.mxu0 %v1011
    %1556 = vmatprep.subr.bf16.mxu0 0
    %1557 = vmatpush1.bf16.msra.mxu0 %v1014
    %1558 = vmatprep.subr.bf16.mxu0 0
    %1559 = vmatpush1.bf16.msra.mxu0 %v1017
    %1560 = vmatprep.subr.bf16.mxu0 0
    %1561 = vmatpush1.bf16.msra.mxu0 %v1020
    %1562 = vmatprep.subr.bf16.mxu0 0
    %1563 = vmatpush1.bf16.msra.mxu0 %v1023
    %1564 = vmatprep.subr.bf16.mxu0 0
    %1565 = vmatpush1.bf16.msra.mxu0 %v1026
    %1566 = vmatprep.subr.bf16.mxu0 0
    %1567 = vmatpush1.bf16.msra.mxu0 %v1029
    %1568 = vmatprep.subr.bf16.mxu0 0
    %1569 = vmatpush1.bf16.msra.mxu0 %v1032
    %1570 = vmatprep.subr.bf16.mxu0 0
    %1571 = vmatpush1.bf16.msra.mxu0 %v1035
    %1572 = vmatprep.subr.bf16.mxu0 0
    %1573 = vmatpush1.bf16.msra.mxu0 %v1038
    %1574 = vmatprep.subr.bf16.mxu0 0
    %1575 = vmatpush1.bf16.msra.mxu0 %v1041
    %1576 = vmatprep.subr.bf16.mxu0 0
    %1577 = vmatpush1.bf16.msra.mxu0 %v1044
    %1578 = vmatprep.subr.bf16.mxu0 0
    %1579 = vmatpush1.bf16.msra.mxu0 %v1047
    %1580 = vmatprep.mubr.bf16.mxu0 %v340
    %1581 = vmatmul.mubr.bf16.gmra.mrb[0].mxu0 %v326
    %v1582 = vpop.f32.mrb[0].mxu0
    %v1583 = vadd.f32 0.0, %v1582
    %v1584 = vpop.f32.mrb[0].mxu0
    %v1585 = vpop.f32.mrb[0].mxu0
    %v1586 = vpop.f32.mrb[0].mxu0
    %1587 = vdwg.mxu0
    %1588 = vmatprep.subr.bf16.mxu0 0
    %1589 = vmatpush1.bf16.msra.mxu0 %v1050
    %1590 = vmatprep.subr.bf16.mxu0 0
    %1591 = vmatpush1.bf16.msra.mxu0 %v1053
    %1592 = vmatprep.subr.bf16.mxu0 0
    %1593 = vmatpush1.bf16.msra.mxu0 %v1056
    %1594 = vmatprep.subr.bf16.mxu0 0
    %1595 = vmatpush1.bf16.msra.mxu0 %v1059
    %1596 = vmatprep.subr.bf16.mxu0 0
    %1597 = vmatpush1.bf16.msra.mxu0 %v1062
    %1598 = vmatprep.subr.bf16.mxu0 0
    %1599 = vmatpush1.bf16.msra.mxu0 %v1065
    %1600 = vmatprep.subr.bf16.mxu0 0
    %1601 = vmatpush1.bf16.msra.mxu0 %v1068
    %1602 = vmatprep.subr.bf16.mxu0 0
    %1603 = vmatpush1.bf16.msra.mxu0 %v1071
    %1604 = vmatprep.subr.bf16.mxu0 0
    %1605 = vmatpush1.bf16.msra.mxu0 %v1074
    %1606 = vmatprep.subr.bf16.mxu0 0
    %1607 = vmatpush1.bf16.msra.mxu0 %v1077
    %1608 = vmatprep.subr.bf16.mxu0 0
    %1609 = vmatpush1.bf16.msra.mxu0 %v1080
    %1610 = vmatprep.subr.bf16.mxu0 0
    %1611 = vmatpush1.bf16.msra.mxu0 %v1083
    %1612 = vmatprep.subr.bf16.mxu0 0
    %1613 = vmatpush1.bf16.msra.mxu0 %v1086
    %1614 = vmatprep.subr.bf16.mxu0 0
    %1615 = vmatpush1.bf16.msra.mxu0 %v1089
    %1616 = vmatprep.subr.bf16.mxu0 0
    %1617 = vmatpush1.bf16.msra.mxu0 %v1092
    %1618 = vmatprep.subr.bf16.mxu0 0
    %1619 = vmatpush1.bf16.msra.mxu0 %v1095
    %1620 = vmatprep.mubr.bf16.mxu0 %v350
    %1621 = vmatmul.mubr.bf16.gmra.mrb[0].mxu0 %v348
    %v1622 = vpop.f32.mrb[0].mxu0
    %v1623 = vadd.f32 %v1583, %v1622
    %v1624 = vpop.f32.mrb[0].mxu0
    %v1625 = vpop.f32.mrb[0].mxu0
    %v1626 = vpop.f32.mrb[0].mxu0
    %1627 = vdwg.mxu0
    %1628 = vmatprep.subr.bf16.mxu0 0
    %1629 = vmatpush1.bf16.msra.mxu0 %v1098
    %1630 = vmatprep.subr.bf16.mxu0 0
    %1631 = vmatpush1.bf16.msra.mxu0 %v1101
    %1632 = vmatprep.subr.bf16.mxu0 0
    %1633 = vmatpush1.bf16.msra.mxu0 %v1104
    %1634 = vmatprep.subr.bf16.mxu0 0
    %1635 = vmatpush1.bf16.msra.mxu0 %v1107
    %1636 = vmatprep.subr.bf16.mxu0 0
    %1637 = vmatpush1.bf16.msra.mxu0 %v1110
    %1638 = vmatprep.subr.bf16.mxu0 0
    %1639 = vmatpush1.bf16.msra.mxu0 %v1113
    %1640 = vmatprep.subr.bf16.mxu0 0
    %1641 = vmatpush1.bf16.msra.mxu0 %v1116
    %1642 = vmatprep.subr.bf16.mxu0 0
    %1643 = vmatpush1.bf16.msra.mxu0 %v1119
    %1644 = vmatprep.subr.bf16.mxu0 0
    %1645 = vmatpush1.bf16.msra.mxu0 %v1122
    %1646 = vmatprep.subr.bf16.mxu0 0
    %1647 = vmatpush1.bf16.msra.mxu0 %v1125
    %1648 = vmatprep.subr.bf16.mxu0 0
    %1649 = vmatpush1.bf16.msra.mxu0 %v1128
    %1650 = vmatprep.subr.bf16.mxu0 0
    %1651 = vmatpush1.bf16.msra.mxu0 %v1131
    %1652 = vmatprep.subr.bf16.mxu0 0
    %1653 = vmatpush1.bf16.msra.mxu0 %v1134
    %1654 = vmatprep.subr.bf16.mxu0 0
    %1655 = vmatpush1.bf16.msra.mxu0 %v1137
    %1656 = vmatprep.subr.bf16.mxu0 0
    %1657 = vmatpush1.bf16.msra.mxu0 %v1140
    %1658 = vmatprep.subr.bf16.mxu0 0
    %1659 = vmatpush1.bf16.msra.mxu0 %v1143
    %1660 = vmatprep.mubr.bf16.mxu0 %v347
    %1661 = vmatmul.mubr.bf16.gmra.mrb[0].mxu0 %v333
    %v1662 = vpop.f32.mrb[0].mxu0
    %v1663 = vadd.f32 %v1623, %v1662
    %v1664 = vpop.f32.mrb[0].mxu0
    %v1665 = vpop.f32.mrb[0].mxu0
    %v1666 = vpop.f32.mrb[0].mxu0
    %1667 = vdwg.mxu0
    %1668 = vmatprep.subr.bf16.mxu0 0
    %1669 = vmatpush1.bf16.msra.mxu0 %v1146
    %1670 = vmatprep.subr.bf16.mxu0 0
    %1671 = vmatpush1.bf16.msra.mxu0 %v1149
    %1672 = vmatprep.subr.bf16.mxu0 0
    %1673 = vmatpush1.bf16.msra.mxu0 %v1152
    %1674 = vmatprep.subr.bf16.mxu0 0
    %1675 = vmatpush1.bf16.msra.mxu0 %v1155
    %1676 = vmatprep.subr.bf16.mxu0 0
    %1677 = vmatpush1.bf16.msra.mxu0 %v1158
    %1678 = vmatprep.subr.bf16.mxu0 0
    %1679 = vmatpush1.bf16.msra.mxu0 %v1161
    %1680 = vmatprep.subr.bf16.mxu0 0
    %1681 = vmatpush1.bf16.msra.mxu0 %v1164
    %1682 = vmatprep.subr.bf16.mxu0 0
    %1683 = vmatpush1.bf16.msra.mxu0 %v1167
    %1684 = vmatprep.subr.bf16.mxu0 0
    %1685 = vmatpush1.bf16.msra.mxu0 %v1170
    %1686 = vmatprep.subr.bf16.mxu0 0
    %1687 = vmatpush1.bf16.msra.mxu0 %v1173
    %1688 = vmatprep.subr.bf16.mxu0 0
    %1689 = vmatpush1.bf16.msra.mxu0 %v1176
    %1690 = vmatprep.subr.bf16.mxu0 0
    %1691 = vmatpush1.bf16.msra.mxu0 %v1179
    %1692 = vmatprep.subr.bf16.mxu0 0
    %1693 = vmatpush1.bf16.msra.mxu0 %v1182
    %1694 = vmatprep.subr.bf16.mxu0 0
    %1695 = vmatpush1.bf16.msra.mxu0 %v1185
    %1696 = vmatprep.subr.bf16.mxu0 0
    %1697 = vmatpush1.bf16.msra.mxu0 %v1188
    %1698 = vmatprep.subr.bf16.mxu0 0
    %1699 = vmatpush1.bf16.msra.mxu0 %v1191
    %1700 = vmatprep.mubr.bf16.mxu0 %v351
    %1701 = vmatmul.mubr.bf16.gmra.mrb[0].mxu0 %v349
    %v1702 = vpop.f32.mrb[0].mxu0
    %v1703 = vadd.f32 %v1663, %v1702
    %v1704 = vpop.f32.mrb[0].mxu0
    %v1705 = vpop.f32.mrb[0].mxu0
    %v1706 = vpop.f32.mrb[0].mxu0
    %1707 = vdwg.mxu0
    %v1708 = vld [vmem:[%s2] sm:$0x1]
    %v1709 = vlaneseq
    %v1710 = vshrl.u32 %v1709, 7
    %v1711 = vsub.s32 0, %v1710
    %v1712 = vrot.slane %v1708, %v1711
    %v1713 = vadd.f32 %v1542, %v1712
    %1714 = vst [vmem:[#allocation8] sm:$0x3] %v1713
    %v1715 = vadd.f32 %v1542, %v1544
    %v1716 = vld [vmem:[%s2 + $0x1] sm:$0x1]
    %v1717 = vlaneseq
    %v1718 = vshrl.u32 %v1717, 7
    %v1719 = vsub.s32 0, %v1718
    %v1720 = vrot.slane %v1716, %v1719
    %v1721 = vadd.f32 %v1544, %v1720
    %s1722 = scalar_lea.vmem [#allocation8], 2
    %1723 = vst [vmem:[%s1722] sm:$0x3] %v1721
    %v1724 = vadd.f32 %v1715, %v1703
    %v1725 = vld [vmem:[%s2 + $0x2] sm:$0x1]
    %v1726 = vlaneseq
    %v1727 = vshrl.u32 %v1726, 7
    %v1728 = vsub.s32 0, %v1727
    %v1729 = vrot.slane %v1725, %v1728
    %v1730 = vadd.f32 %v1703, %v1729
    %s1731 = scalar_lea.vmem [#allocation8], 4
    %1732 = vst [vmem:[%s1731] sm:$0x3] %v1730
    %v1733 = vld [vmem:[%s2] sm:$0x7]
    %vm1734 = vcmask 1042432
    %v1735 = vsel %vm1734, %v1733, 0.0
    %v1736 = vrot.slane %v1735, 4
    %v1737 = vadd.f32 %v1735, %v1736
    %v1738 = vrot.slane %v1737, 2
    %v1739 = vadd.f32 %v1737, %v1738
    %v1740 = vrot.slane %v1739, 1
    %v1741 = vadd.f32 %v1739, %v1740
    %v1742 = vadd.f32 %v1724, %v1741
    %v1743 = vmul.f32 %v1742, 0.33333334
    %1744 = vst [vmem:[#allocation7] sm:$0x3] %v1743
    // Predicated region
    $region22: #{tpu_custom_call.1} parent=1 // pred_check
      _
    $region23: #{tpu_custom_call.1} parent=1 // pred_check_branch
      %1746 = sbr.rel (0) target = $region25
    $region24: #{tpu_custom_call.1} parent=1 // pred_region
      %s1748 = ssub.s32 32, 32
      %1749 = vsyncadd [#allocation4], %s1748
      %s1751 = sshll.u32 [#allocation7], 4
      %s1752 = int_to_ptr.vmem [resolvable:$true] %s1751
      %1754 = dma.vmem_to_hbm [thread:$0]  %s1752, 32, %s3, [#allocation4]
    $region25: #{tpu_custom_call.1} parent=1 // pred_fallthru
      _
    // Predicated region
    $region26: #{tpu_custom_call.1} parent=1 // pred_check
      _
    $region27: #{tpu_custom_call.1} parent=1 // pred_check_branch
      %1756 = sbr.rel (0) target = $region29
    $region28: #{tpu_custom_call.1} parent=1 // pred_region
      %s1758 = ssub.s32 96, 96
      %1759 = vsyncadd [#allocation9], %s1758
      %s1760 = sshll.u32 [#allocation8], 4
      %s1761 = int_to_ptr.vmem [resolvable:$true] %s1760
      %1766 = dma.vmem_to_hbm [thread:$0]  %s1761, 96, %s4, [#allocation9], 32, 32, 2
    $region29: #{tpu_custom_call.1} parent=1 // pred_fallthru
      _
    // Predicated region
    $region30: #{tpu_custom_call.1} parent=1 // pred_check
      _
    $region31: #{tpu_custom_call.1} parent=1 // pred_check_branch
      %1768 = sbr.rel (0) target = $region33
    $region32: #{tpu_custom_call.1} parent=1 // pred_region
      %1769 = dma.done [#allocation4], 32
    $region33: #{tpu_custom_call.1} parent=1 // pred_fallthru
      _
    // Predicated region
    $region34: #{tpu_custom_call.1} parent=1 // pred_check
      _
    $region35: #{tpu_custom_call.1} parent=1 // pred_check_branch
      %1771 = sbr.rel (0) target = $region37
    $region36: #{tpu_custom_call.1} parent=1 // pred_region
      %1772 = dma.done [#allocation9], 96
    $region37: #{tpu_custom_call.1} parent=1 // pred_fallthru
      _
    %1773 = vsyncpa [#allocation3], 1
    %1774 = vsyncpa [#allocation6], 1
    %1775 = vsyncpa [#allocation4], 1
    %1776 = vsyncpa [#allocation9], 1

</llo_original>
